<compile_context>
chip_gen: v6e
topology: v6e:2x2x1
jax: 0.10.0
libtpu: 0.0.40
codegen_flags: <defaults>
</compile_context>

<pallas_src>
import functools

import jax
import jax.numpy as jnp
from jax.experimental import pallas as pl
from jax.experimental.pallas import tpu as pltpu

_LANE = 128
_SUBLANE = 8


def _round_up(v, m):
    return ((v + m - 1) // m) * m


def gode_kernel(x_ref, a_ref,
                w_enc_ref, b_enc_ref,
                w1_ref, b1_ref, w2s_ref, b2s_ref,
                w_dec_ref, b_dec_ref,
                out_ref, *, ode_steps):
    """Fully fused encode -> ODE -> decode on a flattened (ROWS, .) slab.

    x_ref   : (ROWS, Din)        raw (unpadded) feature width
    a_ref   : (ROWS, ROWS)       block-diagonal normalized adjacency
    weights : lane-padded (see prepare_params); w2s/b2s already scaled by dt
    out_ref : (ROWS, Dout_p)
    """
    # ---- Encoding layer: relu(A_blk @ (X W_enc + b_enc)) ----
    x = x_ref[...]                                             # (ROWS, Din)
    h = jnp.dot(x, w_enc_ref[...], preferred_element_type=jnp.float32) + b_enc_ref[...]
    h = jnp.dot(a_ref[...], h, preferred_element_type=jnp.float32)   # block-diag adjacency mix
    z = jnp.maximum(h, 0.0)

    # ---- ODEBlock: fixed-step Euler on dz/dt = tanh(z W1 + b1) W2 + b2 ----
    # TODO(synk): torchdiffeq adaptive solvers (rtol/atol/adjoint) have no clean
    # Pallas equivalent; a fixed-step explicit Euler integrator is used instead.
    w1 = w1_ref[...]
    w2s = w2s_ref[...]                                         # dt * W2 (folded at prep)
    b1 = b1_ref[...]                                           # (1, D) sublane broadcast
    b2s = b2s_ref[...]                                         # dt * b2

    def euler_step(_, zc):
        f = jnp.tanh(jnp.dot(zc, w1, preferred_element_type=jnp.float32) + b1)
        return zc + (jnp.dot(f, w2s, preferred_element_type=jnp.float32) + b2s)

    z = jax.lax.fori_loop(0, ode_steps, euler_step, z, unroll=True)

    # ---- Decoding layer: sigmoid(z W_dec + b_dec) ----
    o = jnp.dot(z, w_dec_ref[...], preferred_element_type=jnp.float32) + b_dec_ref[...]
    out_ref[...] = jax.nn.sigmoid(o)


def prepare_params(params, *, ode_steps):
    """One-time parameter preparation, hoisted out of the per-call path.

    Pads weights to 128-lane widths (contracting dim of w_enc stays at raw Din so x
    needs no feature-dim padding) and folds dt into W2/b2.
    """
    f32 = jnp.float32
    din, d = params["w_enc"].shape
    dout = params["w_dec"].shape[1]
    d_p = _round_up(d, _LANE)
    dout_p = _round_up(dout, _LANE)
    dt = 1.0 / float(ode_steps)

    def pad2(w, r, c):
        return jnp.zeros((r, c), f32).at[:w.shape[0], :w.shape[1]].set(w.astype(f32))

    return {
        "w_enc": pad2(params["w_enc"], din, d_p),          # K dim kept at raw Din
        "b_enc": pad2(params["b_enc"], 1, d_p),
        "w1": pad2(params["w1"], d_p, d_p),
        "b1": pad2(params["b1"], 1, d_p),
        "w2s": pad2(params["w2"] * dt, d_p, d_p),          # dt folded in
        "b2s": pad2(params["b2"] * dt, 1, d_p),
        "w_dec": pad2(params["w_dec"], d_p, dout_p),
        "b_dec": pad2(params["b_dec"], 1, dout_p),
        "dims": (din, d, dout, d_p, dout_p),               # static Python ints
        "ode_steps": int(ode_steps),
    }


def gode_forward(x, adj, prep):
    """x: (T, N, Din) float32, adj: (T, N, N) float32 -> (T, N, Dout) float32."""
    f32 = jnp.float32
    T, N, din = x.shape
    din_w, d, dout, d_p, dout_p = prep["dims"]
    assert din == din_w, "feature width mismatch vs prepared params"

    rows0 = T * N
    # Row count padded to a full 128 lanes so the block-diagonal adjacency matmul
    # and all projections get lane-dense K/N feeds and unmasked stores.
    ROWS = _round_up(rows0, _LANE)

    # Flatten node/time into one MXU-friendly M dimension.
    x_flat = jnp.zeros((ROWS, din), f32).at[:rows0].set(
        x.astype(f32).reshape(rows0, din))

    # Block-diagonal adjacency: one (ROWS, ROWS) matrix holding the T per-timestep
    # (N, N) blocks on the diagonal.  (T*N)^2 f32 is 64 KiB at these shapes.
    # TODO(synk): for large T*N (thousands), keep the per-timestep tiling instead of
    # a dense (T*N)^2 block-diagonal matrix (VMEM is 64 MiB on v7x).
    blk = (adj.astype(f32)[:, :, None, :]
           * jnp.eye(T, dtype=f32)[:, None, :, None]).reshape(rows0, rows0)
    a_blk = jnp.zeros((ROWS, ROWS), f32).at[:rows0, :rows0].set(blk)

    kernel = functools.partial(gode_kernel, ode_steps=prep["ode_steps"])
    full = lambda i: (0, 0)   # single grid step: every block is the whole array

    out = pl.pallas_call(
        kernel,
        out_shape=jax.ShapeDtypeStruct((ROWS, dout_p), f32),
        grid=(1,),
        in_specs=[
            pl.BlockSpec((ROWS, din), full),      # x  (raw Din width == full array dim)
            pl.BlockSpec((ROWS, ROWS), full),     # block-diagonal adjacency
            pl.BlockSpec((din, d_p), full),       # w_enc
            pl.BlockSpec((1, d_p), full),         # b_enc
            pl.BlockSpec((d_p, d_p), full),       # w1
            pl.BlockSpec((1, d_p), full),         # b1
            pl.BlockSpec((d_p, d_p), full),       # w2s (dt-folded)
            pl.BlockSpec((1, d_p), full),         # b2s (dt-folded)
            pl.BlockSpec((d_p, dout_p), full),    # w_dec
            pl.BlockSpec((1, dout_p), full),      # b_dec
        ],
        out_specs=pl.BlockSpec((ROWS, dout_p), full),
        compiler_params=pltpu.CompilerParams(
            dimension_semantics=("arbitrary",)),
    )(x_flat, a_blk, prep["w_enc"], prep["b_enc"], prep["w1"], prep["b1"],
      prep["w2s"], prep["b2s"], prep["w_dec"], prep["b_dec"])

    return out[:rows0, :dout].reshape(T, N, dout)


def gode_reference(x, adj, params, *, ode_steps=4):
    """Plain-JAX reference of the same forward pass (for correctness check)."""
    h = jnp.einsum("tnm,tmd->tnd", adj,
                   jnp.einsum("tnc,cd->tnd", x, params["w_enc"]) + params["b_enc"])
    h = jnp.maximum(h, 0.0)
    dt = 1.0 / float(ode_steps)
    z = h
    for _ in range(ode_steps):
        f = jnp.tanh(jnp.einsum("tnd,de->tne", z, params["w1"]) + params["b1"])
        f = jnp.einsum("tnd,de->tne", f, params["w2"]) + params["b2"]
        z = z + dt * f
    o = jnp.einsum("tnd,de->tne", z, params["w_dec"]) + params["b_dec"]
    return jax.nn.sigmoid(o)


def init_params(key, din, d, dout):
    ks = jax.random.split(key, 5)

    def glorot(k, shape):
        fan_in, fan_out = shape
        lim = (6.0 / (fan_in + fan_out)) ** 0.5
        return jax.random.uniform(k, shape, jnp.float32, -lim, lim)

    return {
        "w_enc": glorot(ks[0], (din, d)), "b_enc": jnp.zeros((1, d), jnp.float32),
        "w1": glorot(ks[1], (d, d)),      "b1": jnp.zeros((1, d), jnp.float32),
        "w2": glorot(ks[2], (d, d)),      "b2": jnp.zeros((1, d), jnp.float32),
        "w_dec": glorot(ks[3], (d, dout)), "b_dec": jnp.zeros((1, dout), jnp.float32),
    }


if __name__ == "__main__":
    # Small, forward-consistent shapes.
    num_feat, num_gdv, num_pr = 4, 8, 1
    encoding_layer_config = 32            # args.encoding_layer_config
    time_length = 8
    num_time_steps = time_length - 1      # tasktype != 'multisteps'
    N = 16                                # nodes per graph
    din = num_feat + num_gdv + num_pr     # 13
    dout = encoding_layer_config          # decoder keeps embedding width
    ode_steps = 4

    key = jax.random.PRNGKey(0)
    k_feat, k_gdv, k_pr, k_adj, k_par = jax.random.split(key, 5)

    feat = jax.random.normal(k_feat, (num_time_steps, N, num_feat), jnp.float32)
    gdv = jax.random.normal(k_gdv, (num_time_steps, N, num_gdv), jnp.float32)
    pr = jax.random.uniform(k_pr, (num_time_steps, N, num_pr), jnp.float32)

    # Random symmetric graphs -> D^{-1/2}(A+I)D^{-1/2}  (glue in plain JAX).
    a = (jax.random.uniform(k_adj, (num_time_steps, N, N)) > 0.7).astype(jnp.float32)
    a = jnp.maximum(a, jnp.swapaxes(a, 1, 2))
    a = a + jnp.eye(N, dtype=jnp.float32)[None]
    dinv = 1.0 / jnp.sqrt(jnp.sum(a, axis=-1))
    adj = a * dinv[:, :, None] * dinv[:, None, :]

    x = jnp.concatenate([feat, gdv, pr], axis=-1)          # (T, N, 13)
    params = init_params(k_par, din, encoding_layer_config, dout)

    # One-time parameter prep (padding + dt folding) hoisted out of the call path.
    prep = prepare_params(params, ode_steps=ode_steps)
    prep = jax.tree_util.tree_map(
        lambda v: jax.block_until_ready(v) if isinstance(v, jax.Array) else v, prep)

    out = gode_forward(x, adj, prep)
    out = jax.block_until_ready(out)

    ref = gode_reference(x, adj, params, ode_steps=ode_steps)
    assert out.shape == (num_time_steps, N, dout)
    assert jnp.allclose(out, ref, atol=1e-5, rtol=1e-5), "Pallas output mismatch"

    print("KERNEL_OK")
</pallas_src>

<mosaic_0001>
module attributes {stable_mosaic.version = 11 : i64} {
  func.func @gode_kernel(%arg0: i32, %arg1: memref<128x13xf32, #tpu.memory_space<vmem>>, %arg2: memref<128x128xf32, #tpu.memory_space<vmem>>, %arg3: memref<13x128xf32, #tpu.memory_space<vmem>>, %arg4: memref<1x128xf32, #tpu.memory_space<vmem>>, %arg5: memref<128x128xf32, #tpu.memory_space<vmem>>, %arg6: memref<1x128xf32, #tpu.memory_space<vmem>>, %arg7: memref<128x128xf32, #tpu.memory_space<vmem>>, %arg8: memref<1x128xf32, #tpu.memory_space<vmem>>, %arg9: memref<128x128xf32, #tpu.memory_space<vmem>>, %arg10: memref<1x128xf32, #tpu.memory_space<vmem>>, %arg11: memref<128x128xf32, #tpu.memory_space<vmem>>) attributes {dimension_semantics = [#tpu.dimension_semantics<arbitrary>], iteration_bounds = array<i64: 1>, scalar_prefetch = 0 : i64, scratch_operands = 0 : i64, tpu.core_type = #tpu.core_type<tc>, window_params = [{pipeline_mode = #tpu.pipeline_mode<synchronous>, transform_indices = @transform_0, window_bounds = array<i64: 128, 13>}, {pipeline_mode = #tpu.pipeline_mode<synchronous>, transform_indices = @transform_1, window_bounds = array<i64: 128, 128>}, {pipeline_mode = #tpu.pipeline_mode<synchronous>, transform_indices = @transform_2, window_bounds = array<i64: 13, 128>}, {pipeline_mode = #tpu.pipeline_mode<synchronous>, transform_indices = @transform_3, window_bounds = array<i64: 1, 128>}, {pipeline_mode = #tpu.pipeline_mode<synchronous>, transform_indices = @transform_4, window_bounds = array<i64: 128, 128>}, {pipeline_mode = #tpu.pipeline_mode<synchronous>, transform_indices = @transform_5, window_bounds = array<i64: 1, 128>}, {pipeline_mode = #tpu.pipeline_mode<synchronous>, transform_indices = @transform_6, window_bounds = array<i64: 128, 128>}, {pipeline_mode = #tpu.pipeline_mode<synchronous>, transform_indices = @transform_7, window_bounds = array<i64: 1, 128>}, {pipeline_mode = #tpu.pipeline_mode<synchronous>, transform_indices = @transform_8, window_bounds = array<i64: 128, 128>}, {pipeline_mode = #tpu.pipeline_mode<synchronous>, transform_indices = @transform_9, window_bounds = array<i64: 1, 128>}, {pipeline_mode = #tpu.pipeline_mode<synchronous>, transform_indices = @transform_10, window_bounds = array<i64: 128, 128>}]} {
    %c0 = arith.constant 0 : index
    %c0_0 = arith.constant 0 : index
    %0 = vector.load %arg1[%c0, %c0_0] : memref<128x13xf32, #tpu.memory_space<vmem>>, vector<128x13xf32>
    %c0_1 = arith.constant 0 : index
    %c0_2 = arith.constant 0 : index
    %1 = vector.load %arg3[%c0_1, %c0_2] : memref<13x128xf32, #tpu.memory_space<vmem>>, vector<13x128xf32>
    %cst = arith.constant dense<0.000000e+00> : vector<128x128xf32>
    %2 = tpu.matmul %0, %1, %cst {dimension_numbers = #tpu.dot_dimension_numbers<[1], [0], [0], [1], [0, 0, 1, 1], [], []>} : vector<128x13xf32>, vector<13x128xf32>, vector<128x128xf32> -> vector<128x128xf32>
    %c0_3 = arith.constant 0 : index
    %c0_4 = arith.constant 0 : index
    %3 = vector.load %arg4[%c0_3, %c0_4] : memref<1x128xf32, #tpu.memory_space<vmem>>, vector<1x128xf32>
    %4 = vector.broadcast %3 : vector<1x128xf32> to vector<128x128xf32>
    %5 = arith.addf %2, %4 : vector<128x128xf32>
    %c0_5 = arith.constant 0 : index
    %c0_6 = arith.constant 0 : index
    %6 = vector.load %arg2[%c0_5, %c0_6] : memref<128x128xf32, #tpu.memory_space<vmem>>, vector<128x128xf32>
    %cst_7 = arith.constant dense<0.000000e+00> : vector<128x128xf32>
    %7 = tpu.matmul %6, %5, %cst_7 {dimension_numbers = #tpu.dot_dimension_numbers<[1], [0], [0], [1], [0, 0, 1, 1], [], []>} : vector<128x128xf32>, vector<128x128xf32>, vector<128x128xf32> -> vector<128x128xf32>
    %cst_8 = arith.constant 0.000000e+00 : f32
    %8 = vector.broadcast %cst_8 : f32 to vector<128x128xf32>
    %9 = arith.maximumf %7, %8 : vector<128x128xf32>
    %c0_9 = arith.constant 0 : index
    %c0_10 = arith.constant 0 : index
    %10 = vector.load %arg5[%c0_9, %c0_10] : memref<128x128xf32, #tpu.memory_space<vmem>>, vector<128x128xf32>
    %c0_11 = arith.constant 0 : index
    %c0_12 = arith.constant 0 : index
    %11 = vector.load %arg7[%c0_11, %c0_12] : memref<128x128xf32, #tpu.memory_space<vmem>>, vector<128x128xf32>
    %c0_13 = arith.constant 0 : index
    %c0_14 = arith.constant 0 : index
    %12 = vector.load %arg6[%c0_13, %c0_14] : memref<1x128xf32, #tpu.memory_space<vmem>>, vector<1x128xf32>
    %c0_15 = arith.constant 0 : index
    %c0_16 = arith.constant 0 : index
    %13 = vector.load %arg8[%c0_15, %c0_16] : memref<1x128xf32, #tpu.memory_space<vmem>>, vector<1x128xf32>
    %c0_i32 = arith.constant 0 : i32
    %cst_17 = arith.constant dense<0.000000e+00> : vector<128x128xf32>
    %14 = tpu.matmul %9, %10, %cst_17 {dimension_numbers = #tpu.dot_dimension_numbers<[1], [0], [0], [1], [0, 0, 1, 1], [], []>} : vector<128x128xf32>, vector<128x128xf32>, vector<128x128xf32> -> vector<128x128xf32>
    %15 = vector.broadcast %12 : vector<1x128xf32> to vector<128x128xf32>
    %16 = arith.addf %14, %15 : vector<128x128xf32>
    %17 = math.tanh %16 : vector<128x128xf32>
    %cst_18 = arith.constant dense<0.000000e+00> : vector<128x128xf32>
    %18 = tpu.matmul %17, %11, %cst_18 {dimension_numbers = #tpu.dot_dimension_numbers<[1], [0], [0], [1], [0, 0, 1, 1], [], []>} : vector<128x128xf32>, vector<128x128xf32>, vector<128x128xf32> -> vector<128x128xf32>
    %19 = vector.broadcast %13 : vector<1x128xf32> to vector<128x128xf32>
    %20 = arith.addf %18, %19 : vector<128x128xf32>
    %21 = arith.addf %9, %20 : vector<128x128xf32>
    %c1_i32 = arith.constant 1 : i32
    %cst_19 = arith.constant dense<0.000000e+00> : vector<128x128xf32>
    %22 = tpu.matmul %21, %10, %cst_19 {dimension_numbers = #tpu.dot_dimension_numbers<[1], [0], [0], [1], [0, 0, 1, 1], [], []>} : vector<128x128xf32>, vector<128x128xf32>, vector<128x128xf32> -> vector<128x128xf32>
    %23 = vector.broadcast %12 : vector<1x128xf32> to vector<128x128xf32>
    %24 = arith.addf %22, %23 : vector<128x128xf32>
    %25 = math.tanh %24 : vector<128x128xf32>
    %cst_20 = arith.constant dense<0.000000e+00> : vector<128x128xf32>
    %26 = tpu.matmul %25, %11, %cst_20 {dimension_numbers = #tpu.dot_dimension_numbers<[1], [0], [0], [1], [0, 0, 1, 1], [], []>} : vector<128x128xf32>, vector<128x128xf32>, vector<128x128xf32> -> vector<128x128xf32>
    %27 = vector.broadcast %13 : vector<1x128xf32> to vector<128x128xf32>
    %28 = arith.addf %26, %27 : vector<128x128xf32>
    %29 = arith.addf %21, %28 : vector<128x128xf32>
    %c2_i32 = arith.constant 2 : i32
    %cst_21 = arith.constant dense<0.000000e+00> : vector<128x128xf32>
    %30 = tpu.matmul %29, %10, %cst_21 {dimension_numbers = #tpu.dot_dimension_numbers<[1], [0], [0], [1], [0, 0, 1, 1], [], []>} : vector<128x128xf32>, vector<128x128xf32>, vector<128x128xf32> -> vector<128x128xf32>
    %31 = vector.broadcast %12 : vector<1x128xf32> to vector<128x128xf32>
    %32 = arith.addf %30, %31 : vector<128x128xf32>
    %33 = math.tanh %32 : vector<128x128xf32>
    %cst_22 = arith.constant dense<0.000000e+00> : vector<128x128xf32>
    %34 = tpu.matmul %33, %11, %cst_22 {dimension_numbers = #tpu.dot_dimension_numbers<[1], [0], [0], [1], [0, 0, 1, 1], [], []>} : vector<128x128xf32>, vector<128x128xf32>, vector<128x128xf32> -> vector<128x128xf32>
    %35 = vector.broadcast %13 : vector<1x128xf32> to vector<128x128xf32>
    %36 = arith.addf %34, %35 : vector<128x128xf32>
    %37 = arith.addf %29, %36 : vector<128x128xf32>
    %c3_i32 = arith.constant 3 : i32
    %cst_23 = arith.constant dense<0.000000e+00> : vector<128x128xf32>
    %38 = tpu.matmul %37, %10, %cst_23 {dimension_numbers = #tpu.dot_dimension_numbers<[1], [0], [0], [1], [0, 0, 1, 1], [], []>} : vector<128x128xf32>, vector<128x128xf32>, vector<128x128xf32> -> vector<128x128xf32>
    %39 = vector.broadcast %12 : vector<1x128xf32> to vector<128x128xf32>
    %40 = arith.addf %38, %39 : vector<128x128xf32>
    %41 = math.tanh %40 : vector<128x128xf32>
    %cst_24 = arith.constant dense<0.000000e+00> : vector<128x128xf32>
    %42 = tpu.matmul %41, %11, %cst_24 {dimension_numbers = #tpu.dot_dimension_numbers<[1], [0], [0], [1], [0, 0, 1, 1], [], []>} : vector<128x128xf32>, vector<128x128xf32>, vector<128x128xf32> -> vector<128x128xf32>
    %43 = vector.broadcast %13 : vector<1x128xf32> to vector<128x128xf32>
    %44 = arith.addf %42, %43 : vector<128x128xf32>
    %45 = arith.addf %37, %44 : vector<128x128xf32>
    %c0_25 = arith.constant 0 : index
    %c0_26 = arith.constant 0 : index
    %46 = vector.load %arg9[%c0_25, %c0_26] : memref<128x128xf32, #tpu.memory_space<vmem>>, vector<128x128xf32>
    %cst_27 = arith.constant dense<0.000000e+00> : vector<128x128xf32>
    %47 = tpu.matmul %45, %46, %cst_27 {dimension_numbers = #tpu.dot_dimension_numbers<[1], [0], [0], [1], [0, 0, 1, 1], [], []>} : vector<128x128xf32>, vector<128x128xf32>, vector<128x128xf32> -> vector<128x128xf32>
    %c0_28 = arith.constant 0 : index
    %c0_29 = arith.constant 0 : index
    %48 = vector.load %arg10[%c0_28, %c0_29] : memref<1x128xf32, #tpu.memory_space<vmem>>, vector<1x128xf32>
    %49 = vector.broadcast %48 : vector<1x128xf32> to vector<128x128xf32>
    %50 = arith.addf %47, %49 : vector<128x128xf32>
    %51 = arith.negf %50 : vector<128x128xf32>
    %52 = math.exp %51 : vector<128x128xf32>
    %cst_30 = arith.constant 1.000000e+00 : f32
    %53 = vector.broadcast %cst_30 : f32 to vector<128x128xf32>
    %54 = arith.addf %53, %52 : vector<128x128xf32>
    %55 = arith.divf %53, %54 : vector<128x128xf32>
    %c0_31 = arith.constant 0 : index
    %c0_32 = arith.constant 0 : index
    %56 = vector.load %arg11[%c0_31, %c0_32] : memref<128x128xf32, #tpu.memory_space<vmem>>, vector<128x128xf32>
    tpu.vector_store %arg11[%c0_31, %c0_32], %55 {strides = array<i32>} : memref<128x128xf32, #tpu.memory_space<vmem>>, vector<128x128xf32>,
    return
  }
  func.func @transform_0(%arg0: i32) -> (i32, i32) {
    %c0_i32 = arith.constant 0 : i32
    %c0_i32_0 = arith.constant 0 : i32
    %c0_i32_1 = arith.constant 0 : i32
    return %c0_i32, %c0_i32_0 : i32, i32
  }
  func.func @transform_1(%arg0: i32) -> (i32, i32) {
    %c0_i32 = arith.constant 0 : i32
    %c0_i32_0 = arith.constant 0 : i32
    %c0_i32_1 = arith.constant 0 : i32
    return %c0_i32, %c0_i32_0 : i32, i32
  }
  func.func @transform_2(%arg0: i32) -> (i32, i32) {
    %c0_i32 = arith.constant 0 : i32
    %c0_i32_0 = arith.constant 0 : i32
    %c0_i32_1 = arith.constant 0 : i32
    return %c0_i32, %c0_i32_0 : i32, i32
  }
  func.func @transform_3(%arg0: i32) -> (i32, i32) {
    %c0_i32 = arith.constant 0 : i32
    %c0_i32_0 = arith.constant 0 : i32
    %c0_i32_1 = arith.constant 0 : i32
    return %c0_i32, %c0_i32_0 : i32, i32
  }
  func.func @transform_4(%arg0: i32) -> (i32, i32) {
    %c0_i32 = arith.constant 0 : i32
    %c0_i32_0 = arith.constant 0 : i32
    %c0_i32_1 = arith.constant 0 : i32
    return %c0_i32, %c0_i32_0 : i32, i32
  }
  func.func @transform_5(%arg0: i32) -> (i32, i32) {
    %c0_i32 = arith.constant 0 : i32
    %c0_i32_0 = arith.constant 0 : i32
    %c0_i32_1 = arith.constant 0 : i32
    return %c0_i32, %c0_i32_0 : i32, i32
  }
  func.func @transform_6(%arg0: i32) -> (i32, i32) {
    %c0_i32 = arith.constant 0 : i32
    %c0_i32_0 = arith.constant 0 : i32
    %c0_i32_1 = arith.constant 0 : i32
    return %c0_i32, %c0_i32_0 : i32, i32
  }
  func.func @transform_7(%arg0: i32) -> (i32, i32) {
    %c0_i32 = arith.constant 0 : i32
    %c0_i32_0 = arith.constant 0 : i32
    %c0_i32_1 = arith.constant 0 : i32
    return %c0_i32, %c0_i32_0 : i32, i32
  }
  func.func @transform_8(%arg0: i32) -> (i32, i32) {
    %c0_i32 = arith.constant 0 : i32
    %c0_i32_0 = arith.constant 0 : i32
    %c0_i32_1 = arith.constant 0 : i32
    return %c0_i32, %c0_i32_0 : i32, i32
  }
  func.func @transform_9(%arg0: i32) -> (i32, i32) {
    %c0_i32 = arith.constant 0 : i32
    %c0_i32_0 = arith.constant 0 : i32
    %c0_i32_1 = arith.constant 0 : i32
    return %c0_i32, %c0_i32_0 : i32, i32
  }
  func.func @transform_10(%arg0: i32) -> (i32, i32) {
    %c0_i32 = arith.constant 0 : i32
    %c0_i32_0 = arith.constant 0 : i32
    %c0_i32_1 = arith.constant 0 : i32
    return %c0_i32, %c0_i32_0 : i32, i32
  }
}

</mosaic_0001>

<llo_original>
// kernel: tpu_custom_call.1
$region0: #{tpu_custom_call.1}
  #allocation0 [shape = 'u32[]', space=smem, size = 0x4, offset = 0x4, fixed_abs, tag = 'smem constant byte address 0x4 - core index']
  #allocation1 [shape = 'u32[144,128]{1,0:T(1,128)}', space=vmem, size = 0x12000, scoped, tag = 'internal scratch']
  %s0 = inlined_call_operand.vmem [shape: f32[128,13], index: 0, kind: input, shape index: {}]
  %s1 = inlined_call_operand.vmem [shape: f32[128,128], index: 1, kind: input, shape index: {}]
  %s2 = inlined_call_operand.vmem [shape: f32[13,128], index: 2, kind: input, shape index: {}]
  %s3 = inlined_call_operand.vmem [shape: f32[1,128], index: 3, kind: input, shape index: {}]
  %s4 = inlined_call_operand.hbm [shape: f32[128,128], index: 4, kind: input, shape index: {}]
  %s5 = inlined_call_operand.vmem [shape: f32[1,128], index: 5, kind: input, shape index: {}]
  %s6 = inlined_call_operand.hbm [shape: f32[128,128], index: 6, kind: input, shape index: {}]
  %s7 = inlined_call_operand.vmem [shape: f32[1,128], index: 7, kind: input, shape index: {}]
  %s8 = inlined_call_operand.hbm [shape: f32[128,128], index: 8, kind: input, shape index: {}]
  %s9 = inlined_call_operand.vmem [shape: f32[1,128], index: 9, kind: input, shape index: {}]
  %s10 = inlined_call_operand.hbm [shape: f32[128,128], index: 10, kind: output, shape index: {}]
  %s11 = sld [smem:[#allocation0]]
  $region62: #{tpu_custom_call.1} parent=0
    _
  %s13 = ssub.s32 1, %s11
  %s14 = scalar_select 0, %s13, %s11
  $region1: #{tpu_custom_call.1} parent=0
    #allocation2 [shape = 'u8[65536]{0}', space=vmem, size = 0x10000, scoped, tag = 'input window, operand 4, single buffered']
    #allocation3 [shape = 's32[1]{0}', space=sflag, size = 0x4, scoped, tag = 'scoped memory for tpu_custom_call.1']
    #allocation4 [shape = 's32[1]{0}', space=sflag, size = 0x4, scoped, tag = 'scoped memory for tpu_custom_call.1']
    #allocation5 [shape = 'u8[65536]{0}', space=vmem, size = 0x10000, scoped, tag = 'input window, operand 6, single buffered']
    #allocation6 [shape = 's32[1]{0}', space=sflag, size = 0x4, scoped, tag = 'scoped memory for tpu_custom_call.1']
    #allocation7 [shape = 'u8[65536]{0}', space=vmem, size = 0x10000, scoped, tag = 'input window, operand 8, single buffered']
    #allocation8 [shape = 'u8[65536]{0}', space=vmem, size = 0x10000, scoped, tag = 'output window, operand 0, single buffered']
    %15 = vsyncpa [#allocation3], 0
    %16 = vsyncpa [#allocation6], 0
    %17 = vsyncpa [#allocation4], 0
    // Predicated region
    $region2: #{tpu_custom_call.1} parent=1 // pred_check
      _
    $region3: #{tpu_custom_call.1} parent=1 // pred_check_branch
      %19 = sbr.rel (0) target = $region5
    $region4: #{tpu_custom_call.1} parent=1 // pred_region
      _
    $region5: #{tpu_custom_call.1} parent=1 // pred_fallthru
      _
    // Predicated region
    $region6: #{tpu_custom_call.1} parent=1 // pred_check
      _
    $region7: #{tpu_custom_call.1} parent=1 // pred_check_branch
      %21 = sbr.rel (0) target = $region9
    $region8: #{tpu_custom_call.1} parent=1 // pred_region
      _
    $region9: #{tpu_custom_call.1} parent=1 // pred_fallthru
      _
    // Predicated region
    $region10: #{tpu_custom_call.1} parent=1 // pred_check
      _
    $region11: #{tpu_custom_call.1} parent=1 // pred_check_branch
      %23 = sbr.rel (0) target = $region13
    $region12: #{tpu_custom_call.1} parent=1 // pred_region
      _
    $region13: #{tpu_custom_call.1} parent=1 // pred_fallthru
      _
    // Predicated region
    $region14: #{tpu_custom_call.1} parent=1 // pred_check
      _
    $region15: #{tpu_custom_call.1} parent=1 // pred_check_branch
      %25 = sbr.rel (0) target = $region17
    $region16: #{tpu_custom_call.1} parent=1 // pred_region
      _
    $region17: #{tpu_custom_call.1} parent=1 // pred_fallthru
      _
    // Predicated region
    $region18: #{tpu_custom_call.1} parent=1 // pred_check
      _
    $region19: #{tpu_custom_call.1} parent=1 // pred_check_branch
      %27 = sbr.rel (0) target = $region21
    $region20: #{tpu_custom_call.1} parent=1 // pred_region
      %s29 = ssub.s32 2048, 2048
      %30 = vsyncadd [#allocation3], %s29
      %s31 = sshll.u32 [#allocation2], 4
      %s32 = int_to_ptr.vmem [resolvable:$true] %s31
      %37 = dma.hbm_to_vmem [thread:$0]  %s4, 2048, %s32, [#allocation3], 128, 128, 8
    $region21: #{tpu_custom_call.1} parent=1 // pred_fallthru
      _
    // Predicated region
    $region22: #{tpu_custom_call.1} parent=1 // pred_check
      _
    $region23: #{tpu_custom_call.1} parent=1 // pred_check_branch
      %39 = sbr.rel (0) target = $region25
    $region24: #{tpu_custom_call.1} parent=1 // pred_region
      _
    $region25: #{tpu_custom_call.1} parent=1 // pred_fallthru
      _
    // Predicated region
    $region26: #{tpu_custom_call.1} parent=1 // pred_check
      _
    $region27: #{tpu_custom_call.1} parent=1 // pred_check_branch
      %41 = sbr.rel (0) target = $region29
    $region28: #{tpu_custom_call.1} parent=1 // pred_region
      %s43 = ssub.s32 2048, 2048
      %44 = vsyncadd [#allocation6], %s43
      %s45 = sshll.u32 [#allocation5], 4
      %s46 = int_to_ptr.vmem [resolvable:$true] %s45
      %51 = dma.hbm_to_vmem [thread:$0]  %s6, 2048, %s46, [#allocation6], 128, 128, 8
    $region29: #{tpu_custom_call.1} parent=1 // pred_fallthru
      _
    // Predicated region
    $region30: #{tpu_custom_call.1} parent=1 // pred_check
      _
    $region31: #{tpu_custom_call.1} parent=1 // pred_check_branch
      %53 = sbr.rel (0) target = $region33
    $region32: #{tpu_custom_call.1} parent=1 // pred_region
      _
    $region33: #{tpu_custom_call.1} parent=1 // pred_fallthru
      _
    // Predicated region
    $region34: #{tpu_custom_call.1} parent=1 // pred_check
      _
    $region35: #{tpu_custom_call.1} parent=1 // pred_check_branch
      %55 = sbr.rel (0) target = $region37
    $region36: #{tpu_custom_call.1} parent=1 // pred_region
      %s57 = ssub.s32 2048, 2048
      %58 = vsyncadd [#allocation6], %s57
      %s59 = sshll.u32 [#allocation7], 4
      %s60 = int_to_ptr.vmem [resolvable:$true] %s59
      %65 = dma.hbm_to_vmem [thread:$0]  %s8, 2048, %s60, [#allocation6], 128, 128, 8
    $region37: #{tpu_custom_call.1} parent=1 // pred_fallthru
      _
    // Predicated region
    $region38: #{tpu_custom_call.1} parent=1 // pred_check
      _
    $region39: #{tpu_custom_call.1} parent=1 // pred_check_branch
      %67 = sbr.rel (0) target = $region41
    $region40: #{tpu_custom_call.1} parent=1 // pred_region
      _
    $region41: #{tpu_custom_call.1} parent=1 // pred_fallthru
      _
    // Predicated region
    $region42: #{tpu_custom_call.1} parent=1 // pred_check
      _
    $region43: #{tpu_custom_call.1} parent=1 // pred_check_branch
      %69 = sbr.rel (0) target = $region45
    $region44: #{tpu_custom_call.1} parent=1 // pred_region
      %70 = dma.done [#allocation3], 2048
    $region45: #{tpu_custom_call.1} parent=1 // pred_fallthru
      _
    // Predicated region
    $region46: #{tpu_custom_call.1} parent=1 // pred_check
      _
    $region47: #{tpu_custom_call.1} parent=1 // pred_check_branch
      %72 = sbr.rel (0) target = $region49
    $region48: #{tpu_custom_call.1} parent=1 // pred_region
      %73 = dma.done [#allocation6], 2048
    $region49: #{tpu_custom_call.1} parent=1 // pred_fallthru
      _
    // Predicated region
    $region50: #{tpu_custom_call.1} parent=1 // pred_check
      _
    $region51: #{tpu_custom_call.1} parent=1 // pred_check_branch
      %75 = sbr.rel (0) target = $region53
    $region52: #{tpu_custom_call.1} parent=1 // pred_region
      %76 = dma.done [#allocation6], 2048
    $region53: #{tpu_custom_call.1} parent=1 // pred_fallthru
      _
    %v77 = vld [vmem:[%s0] sm:$0xff]
    %v78 = vld [vmem:[%s0 + $0x8] sm:$0xff]
    %v79 = vld [vmem:[%s0 + $0x10] sm:$0xff]
    %v80 = vld [vmem:[%s0 + $0x18] sm:$0xff]
    %v81 = vld [vmem:[%s0 + $0x20] sm:$0xff]
    %v82 = vld [vmem:[%s0 + $0x28] sm:$0xff]
    %v83 = vld [vmem:[%s0 + $0x30] sm:$0xff]
    %v84 = vld [vmem:[%s0 + $0x38] sm:$0xff]
    %v85 = vld [vmem:[%s0 + $0x40] sm:$0xff]
    %v86 = vld [vmem:[%s0 + $0x48] sm:$0xff]
    %v87 = vld [vmem:[%s0 + $0x50] sm:$0xff]
    %v88 = vld [vmem:[%s0 + $0x58] sm:$0xff]
    %v89 = vld [vmem:[%s0 + $0x60] sm:$0xff]
    %v90 = vld [vmem:[%s0 + $0x68] sm:$0xff]
    %v91 = vld [vmem:[%s0 + $0x70] sm:$0xff]
    %v92 = vld [vmem:[%s0 + $0x78] sm:$0xff]
    %v93 = vld [vmem:[%s2] sm:$0xff]
    %v94 = vld [vmem:[%s2 + $0x8] sm:$0x1f]
    %v95 = vld [vmem:[%s3] sm:$0x1]
    %v97 = vlaneseq
    %v98 = vshrl.u32 %v97, 7
    %v99 = vsub.s32 0, %v98
    %v100 = vrot.slane %v95, %v99
    %vm102 = vcmask 105472
    %v104 = vsel %vm102, %v77, 0
    %v107 = vsel %vm102, %v78, 0
    %v110 = vsel %vm102, %v79, 0
    %v113 = vsel %vm102, %v80, 0
    %v116 = vsel %vm102, %v81, 0
    %v119 = vsel %vm102, %v82, 0
    %v122 = vsel %vm102, %v83, 0
    %v125 = vsel %vm102, %v84, 0
    %v128 = vsel %vm102, %v85, 0
    %v131 = vsel %vm102, %v86, 0
    %v134 = vsel %vm102, %v87, 0
    %v137 = vsel %vm102, %v88, 0
    %v140 = vsel %vm102, %v89, 0
    %v143 = vsel %vm102, %v90, 0
    %v146 = vsel %vm102, %v91, 0
    %v149 = vsel %vm102, %v92, 0
    %vm151 = vcmask 1044480
    %v153 = vsel %vm151, %v94, 0
    %155 = vmatprep.subr.mxu0 0.0
    %156 = vmatpush1.msra.mxu0 0.0
    %157 = vmatprep.subr.mxu0 0.0
    %158 = vmatpush1.msra.mxu0 0.0
    %159 = vmatprep.subr.mxu0 0.0
    %160 = vmatpush1.msra.mxu0 0.0
    %161 = vmatprep.subr.mxu0 0.0
    %162 = vmatpush1.msra.mxu0 0.0
    %163 = vmatprep.subr.mxu0 0.0
    %164 = vmatpush1.msra.mxu0 0.0
    %165 = vmatprep.subr.mxu0 0.0
    %166 = vmatpush1.msra.mxu0 0.0
    %167 = vmatprep.subr.mxu0 0.0
    %168 = vmatpush1.msra.mxu0 0.0
    %169 = vmatprep.subr.mxu0 0.0
    %170 = vmatpush1.msra.mxu0 0.0
    %171 = vmatprep.subr.mxu0 0.0
    %172 = vmatpush1.msra.mxu0 0.0
    %173 = vmatprep.subr.mxu0 0.0
    %174 = vmatpush1.msra.mxu0 0.0
    %175 = vmatprep.subr.mxu0 0.0
    %176 = vmatpush1.msra.mxu0 0.0
    %177 = vmatprep.subr.mxu0 0.0
    %178 = vmatpush1.msra.mxu0 0.0
    %179 = vmatprep.subr.mxu0 0.0
    %180 = vmatpush1.msra.mxu0 0.0
    %181 = vmatprep.subr.mxu0 0.0
    %182 = vmatpush1.msra.mxu0 0.0
    %183 = vmatprep.subr.mxu0 0.0
    %184 = vmatpush1.msra.mxu0 %v153
    %185 = vmatprep.subr.mxu0 0.0
    %186 = vmatpush1.msra.mxu0 %v93
    %187 = vmatprep.subr.mxu0 0.0
    %188 = vmatpush2.msra.mxu0 0.0
    %189 = vmatprep.subr.mxu0 0.0
    %190 = vmatpush2.msra.mxu0 0.0
    %191 = vmatprep.subr.mxu0 0.0
    %192 = vmatpush2.msra.mxu0 0.0
    %193 = vmatprep.subr.mxu0 0.0
    %194 = vmatpush2.msra.mxu0 0.0
    %195 = vmatprep.subr.mxu0 0.0
    %196 = vmatpush2.msra.mxu0 0.0
    %197 = vmatprep.subr.mxu0 0.0
    %198 = vmatpush2.msra.mxu0 0.0
    %199 = vmatprep.subr.mxu0 0.0
    %200 = vmatpush2.msra.mxu0 0.0
    %201 = vmatprep.subr.mxu0 0.0
    %202 = vmatpush2.msra.mxu0 0.0
    %203 = vmatprep.subr.mxu0 0.0
    %204 = vmatpush2.msra.mxu0 0.0
    %205 = vmatprep.subr.mxu0 0.0
    %206 = vmatpush2.msra.mxu0 0.0
    %207 = vmatprep.subr.mxu0 0.0
    %208 = vmatpush2.msra.mxu0 0.0
    %209 = vmatprep.subr.mxu0 0.0
    %210 = vmatpush2.msra.mxu0 0.0
    %211 = vmatprep.subr.mxu0 0.0
    %212 = vmatpush2.msra.mxu0 0.0
    %213 = vmatprep.subr.mxu0 0.0
    %214 = vmatpush2.msra.mxu0 0.0
    %215 = vmatprep.subr.mxu0 0.0
    %216 = vmatpush2.msra.mxu0 0.0
    %217 = vmatprep.subr.mxu0 0.0
    %218 = vmatpush2.msra.mxu0 0.0
    %219 = vmatprep.mubr.f32.mxu0 0.0
    %220 = vmatmul.mubr.f32.gmra.mxu0 %v104
    %v221 = vpop.f32.mrf.mxu0
    %v222 = vadd.f32 %v100, %v221
    %v223 = vpop.f32.mrf.mxu0
    %224 = vmatprep.mubr.f32.mxu0 0.0
    %225 = vmatmul.mubr.f32.gmra.mxu0 %v107
    %v226 = vpop.f32.mrf.mxu0
    %v227 = vadd.f32 %v100, %v226
    %v228 = vpop.f32.mrf.mxu0
    %229 = vmatprep.mubr.f32.mxu0 0.0
    %230 = vmatmul.mubr.f32.gmra.mxu0 %v110
    %v231 = vpop.f32.mrf.mxu0
    %v232 = vadd.f32 %v100, %v231
    %v233 = vpop.f32.mrf.mxu0
    %234 = vmatprep.mubr.f32.mxu0 0.0
    %235 = vmatmul.mubr.f32.gmra.mxu0 %v113
    %v236 = vpop.f32.mrf.mxu0
    %v237 = vadd.f32 %v100, %v236
    %v238 = vpop.f32.mrf.mxu0
    %239 = vmatprep.mubr.f32.mxu0 0.0
    %240 = vmatmul.mubr.f32.gmra.mxu0 %v116
    %v241 = vpop.f32.mrf.mxu0
    %v242 = vadd.f32 %v100, %v241
    %v243 = vpop.f32.mrf.mxu0
    %244 = vmatprep.mubr.f32.mxu0 0.0
    %245 = vmatmul.mubr.f32.gmra.mxu0 %v119
    %v246 = vpop.f32.mrf.mxu0
    %v247 = vadd.f32 %v100, %v246
    %v248 = vpop.f32.mrf.mxu0
    %249 = vmatprep.mubr.f32.mxu0 0.0
    %250 = vmatmul.mubr.f32.gmra.mxu0 %v122
    %v251 = vpop.f32.mrf.mxu0
    %v252 = vadd.f32 %v100, %v251
    %v253 = vpop.f32.mrf.mxu0
    %254 = vmatprep.mubr.f32.mxu0 0.0
    %255 = vmatmul.mubr.f32.gmra.mxu0 %v125
    %v256 = vpop.f32.mrf.mxu0
    %v257 = vadd.f32 %v100, %v256
    %v258 = vpop.f32.mrf.mxu0
    %259 = vmatprep.mubr.f32.mxu0 0.0
    %260 = vmatmul.mubr.f32.gmra.mxu0 %v128
    %v261 = vpop.f32.mrf.mxu0
    %v262 = vadd.f32 %v100, %v261
    %v263 = vpop.f32.mrf.mxu0
    %264 = vmatprep.mubr.f32.mxu0 0.0
    %265 = vmatmul.mubr.f32.gmra.mxu0 %v131
    %v266 = vpop.f32.mrf.mxu0
    %v267 = vadd.f32 %v100, %v266
    %v268 = vpop.f32.mrf.mxu0
    %269 = vmatprep.mubr.f32.mxu0 0.0
    %270 = vmatmul.mubr.f32.gmra.mxu0 %v134
    %v271 = vpop.f32.mrf.mxu0
    %v272 = vadd.f32 %v100, %v271
    %v273 = vpop.f32.mrf.mxu0
    %274 = vmatprep.mubr.f32.mxu0 0.0
    %275 = vmatmul.mubr.f32.gmra.mxu0 %v137
    %v276 = vpop.f32.mrf.mxu0
    %v277 = vadd.f32 %v100, %v276
    %v278 = vpop.f32.mrf.mxu0
    %279 = vmatprep.mubr.f32.mxu0 0.0
    %280 = vmatmul.mubr.f32.gmra.mxu0 %v140
    %v281 = vpop.f32.mrf.mxu0
    %v282 = vadd.f32 %v100, %v281
    %v283 = vpop.f32.mrf.mxu0
    %284 = vmatprep.mubr.f32.mxu0 0.0
    %285 = vmatmul.mubr.f32.gmra.mxu0 %v143
    %v286 = vpop.f32.mrf.mxu0
    %v287 = vadd.f32 %v100, %v286
    %v288 = vpop.f32.mrf.mxu0
    %289 = vmatprep.mubr.f32.mxu0 0.0
    %290 = vmatmul.mubr.f32.gmra.mxu0 %v146
    %v291 = vpop.f32.mrf.mxu0
    %v292 = vadd.f32 %v100, %v291
    %v293 = vpop.f32.mrf.mxu0
    %294 = vmatprep.mubr.f32.mxu0 0.0
    %295 = vmatmul.mubr.f32.gmra.mxu0 %v149
    %v296 = vpop.f32.mrf.mxu0
    %v297 = vadd.f32 %v100, %v296
    %v298 = vpop.f32.mrf.mxu0
    %299 = vdwg.mxu0
    %v300 = vld [vmem:[%s1] sm:$0xff]
    %v301 = vld [vmem:[%s1 + $0x8] sm:$0xff]
    %v302 = vld [vmem:[%s1 + $0x10] sm:$0xff]
    %v303 = vld [vmem:[%s1 + $0x18] sm:$0xff]
    %v304 = vld [vmem:[%s1 + $0x20] sm:$0xff]
    %v305 = vld [vmem:[%s1 + $0x28] sm:$0xff]
    %v306 = vld [vmem:[%s1 + $0x30] sm:$0xff]
    %v307 = vld [vmem:[%s1 + $0x38] sm:$0xff]
    %v308 = vld [vmem:[%s1 + $0x40] sm:$0xff]
    %v309 = vld [vmem:[%s1 + $0x48] sm:$0xff]
    %v310 = vld [vmem:[%s1 + $0x50] sm:$0xff]
    %v311 = vld [vmem:[%s1 + $0x58] sm:$0xff]
    %v312 = vld [vmem:[%s1 + $0x60] sm:$0xff]
    %v313 = vld [vmem:[%s1 + $0x68] sm:$0xff]
    %v314 = vld [vmem:[%s1 + $0x70] sm:$0xff]
    %v315 = vld [vmem:[%s1 + $0x78] sm:$0xff]
    %316 = vmatprep.subr.mxu0 0.0
    %317 = vmatpush1.msra.mxu0 %v297
    %318 = vmatprep.subr.mxu0 0.0
    %319 = vmatpush1.msra.mxu0 %v292
    %320 = vmatprep.subr.mxu0 0.0
    %321 = vmatpush1.msra.mxu0 %v287
    %322 = vmatprep.subr.mxu0 0.0
    %323 = vmatpush1.msra.mxu0 %v282
    %324 = vmatprep.subr.mxu0 0.0
    %325 = vmatpush1.msra.mxu0 %v277
    %326 = vmatprep.subr.mxu0 0.0
    %327 = vmatpush1.msra.mxu0 %v272
    %328 = vmatprep.subr.mxu0 0.0
    %329 = vmatpush1.msra.mxu0 %v267
    %330 = vmatprep.subr.mxu0 0.0
    %331 = vmatpush1.msra.mxu0 %v262
    %332 = vmatprep.subr.mxu0 0.0
    %333 = vmatpush1.msra.mxu0 %v257
    %334 = vmatprep.subr.mxu0 0.0
    %335 = vmatpush1.msra.mxu0 %v252
    %336 = vmatprep.subr.mxu0 0.0
    %337 = vmatpush1.msra.mxu0 %v247
    %338 = vmatprep.subr.mxu0 0.0
    %339 = vmatpush1.msra.mxu0 %v242
    %340 = vmatprep.subr.mxu0 0.0
    %341 = vmatpush1.msra.mxu0 %v237
    %342 = vmatprep.subr.mxu0 0.0
    %343 = vmatpush1.msra.mxu0 %v232
    %344 = vmatprep.subr.mxu0 0.0
    %345 = vmatpush1.msra.mxu0 %v227
    %346 = vmatprep.subr.mxu0 0.0
    %347 = vmatpush1.msra.mxu0 %v222
    %348 = vmatprep.subr.mxu0 0.0
    %349 = vmatpush2.msra.mxu0 0.0
    %350 = vmatprep.subr.mxu0 0.0
    %351 = vmatpush2.msra.mxu0 0.0
    %352 = vmatprep.subr.mxu0 0.0
    %353 = vmatpush2.msra.mxu0 0.0
    %354 = vmatprep.subr.mxu0 0.0
    %355 = vmatpush2.msra.mxu0 0.0
    %356 = vmatprep.subr.mxu0 0.0
    %357 = vmatpush2.msra.mxu0 0.0
    %358 = vmatprep.subr.mxu0 0.0
    %359 = vmatpush2.msra.mxu0 0.0
    %360 = vmatprep.subr.mxu0 0.0
    %361 = vmatpush2.msra.mxu0 0.0
    %362 = vmatprep.subr.mxu0 0.0
    %363 = vmatpush2.msra.mxu0 0.0
    %364 = vmatprep.subr.mxu0 0.0
    %365 = vmatpush2.msra.mxu0 0.0
    %366 = vmatprep.subr.mxu0 0.0
    %367 = vmatpush2.msra.mxu0 0.0
    %368 = vmatprep.subr.mxu0 0.0
    %369 = vmatpush2.msra.mxu0 0.0
    %370 = vmatprep.subr.mxu0 0.0
    %371 = vmatpush2.msra.mxu0 0.0
    %372 = vmatprep.subr.mxu0 0.0
    %373 = vmatpush2.msra.mxu0 0.0
    %374 = vmatprep.subr.mxu0 0.0
    %375 = vmatpush2.msra.mxu0 0.0
    %376 = vmatprep.subr.mxu0 0.0
    %377 = vmatpush2.msra.mxu0 0.0
    %378 = vmatprep.subr.mxu0 0.0
    %379 = vmatpush2.msra.mxu0 0.0
    %380 = vmatprep.mubr.f32.mxu0 0.0
    %381 = vmatmul.mubr.f32.gmra.mxu0 %v300
    %v382 = vpop.f32.mrf.mxu0
    %v383 = vadd.f32 0.0, %v382
    %v384 = vpop.f32.mrf.mxu0
    %385 = vmatprep.mubr.f32.mxu0 0.0
    %386 = vmatmul.mubr.f32.gmra.mxu0 %v301
    %v387 = vpop.f32.mrf.mxu0
    %v388 = vadd.f32 0.0, %v387
    %v389 = vpop.f32.mrf.mxu0
    %390 = vmatprep.mubr.f32.mxu0 0.0
    %391 = vmatmul.mubr.f32.gmra.mxu0 %v302
    %v392 = vpop.f32.mrf.mxu0
    %v393 = vadd.f32 0.0, %v392
    %v394 = vpop.f32.mrf.mxu0
    %395 = vmatprep.mubr.f32.mxu0 0.0
    %396 = vmatmul.mubr.f32.gmra.mxu0 %v303
    %v397 = vpop.f32.mrf.mxu0
    %v398 = vadd.f32 0.0, %v397
    %v399 = vpop.f32.mrf.mxu0
    %400 = vmatprep.mubr.f32.mxu0 0.0
    %401 = vmatmul.mubr.f32.gmra.mxu0 %v304
    %v402 = vpop.f32.mrf.mxu0
    %v403 = vadd.f32 0.0, %v402
    %v404 = vpop.f32.mrf.mxu0
    %405 = vmatprep.mubr.f32.mxu0 0.0
    %406 = vmatmul.mubr.f32.gmra.mxu0 %v305
    %v407 = vpop.f32.mrf.mxu0
    %v408 = vadd.f32 0.0, %v407
    %v409 = vpop.f32.mrf.mxu0
    %410 = vmatprep.mubr.f32.mxu0 0.0
    %411 = vmatmul.mubr.f32.gmra.mxu0 %v306
    %v412 = vpop.f32.mrf.mxu0
    %v413 = vadd.f32 0.0, %v412
    %v414 = vpop.f32.mrf.mxu0
    %415 = vmatprep.mubr.f32.mxu0 0.0
    %416 = vmatmul.mubr.f32.gmra.mxu0 %v307
    %v417 = vpop.f32.mrf.mxu0
    %v418 = vadd.f32 0.0, %v417
    %v419 = vpop.f32.mrf.mxu0
    %420 = vmatprep.mubr.f32.mxu0 0.0
    %421 = vmatmul.mubr.f32.gmra.mxu0 %v308
    %v422 = vpop.f32.mrf.mxu0
    %v423 = vadd.f32 0.0, %v422
    %v424 = vpop.f32.mrf.mxu0
    %425 = vmatprep.mubr.f32.mxu0 0.0
    %426 = vmatmul.mubr.f32.gmra.mxu0 %v309
    %v427 = vpop.f32.mrf.mxu0
    %v428 = vadd.f32 0.0, %v427
    %v429 = vpop.f32.mrf.mxu0
    %430 = vmatprep.mubr.f32.mxu0 0.0
    %431 = vmatmul.mubr.f32.gmra.mxu0 %v310
    %v432 = vpop.f32.mrf.mxu0
    %v433 = vadd.f32 0.0, %v432
    %v434 = vpop.f32.mrf.mxu0
    %435 = vmatprep.mubr.f32.mxu0 0.0
    %436 = vmatmul.mubr.f32.gmra.mxu0 %v311
    %v437 = vpop.f32.mrf.mxu0
    %v438 = vadd.f32 0.0, %v437
    %v439 = vpop.f32.mrf.mxu0
    %440 = vmatprep.mubr.f32.mxu0 0.0
    %441 = vmatmul.mubr.f32.gmra.mxu0 %v312
    %v442 = vpop.f32.mrf.mxu0
    %v443 = vadd.f32 0.0, %v442
    %v444 = vpop.f32.mrf.mxu0
    %445 = vmatprep.mubr.f32.mxu0 0.0
    %446 = vmatmul.mubr.f32.gmra.mxu0 %v313
    %v447 = vpop.f32.mrf.mxu0
    %v448 = vadd.f32 0.0, %v447
    %v449 = vpop.f32.mrf.mxu0
    %450 = vmatprep.mubr.f32.mxu0 0.0
    %451 = vmatmul.mubr.f32.gmra.mxu0 %v314
    %v452 = vpop.f32.mrf.mxu0
    %v453 = vadd.f32 0.0, %v452
    %v454 = vpop.f32.mrf.mxu0
    %455 = vmatprep.mubr.f32.mxu0 0.0
    %456 = vmatmul.mubr.f32.gmra.mxu0 %v315
    %v457 = vpop.f32.mrf.mxu0
    %v458 = vadd.f32 0.0, %v457
    %v459 = vpop.f32.mrf.mxu0
    %460 = vdwg.mxu0
    %v461 = vmax.f32 %v383, 0.0
    %v462 = vmax.f32 %v388, 0.0
    %v463 = vmax.f32 %v393, 0.0
    %v464 = vmax.f32 %v398, 0.0
    %v465 = vmax.f32 %v403, 0.0
    %v466 = vmax.f32 %v408, 0.0
    %v467 = vmax.f32 %v413, 0.0
    %v468 = vmax.f32 %v418, 0.0
    %v469 = vmax.f32 %v423, 0.0
    %v470 = vmax.f32 %v428, 0.0
    %v471 = vmax.f32 %v433, 0.0
    %v472 = vmax.f32 %v438, 0.0
    %v473 = vmax.f32 %v443, 0.0
    %v474 = vmax.f32 %v448, 0.0
    %v475 = vmax.f32 %v453, 0.0
    %v476 = vmax.f32 %v458, 0.0
    %v477 = vld [vmem:[#allocation2] sm:$0xff]
    %v478 = vld [vmem:[#allocation2 + $0x8] sm:$0xff]
    %v479 = vld [vmem:[#allocation2 + $0x10] sm:$0xff]
    %v480 = vld [vmem:[#allocation2 + $0x18] sm:$0xff]
    %v481 = vld [vmem:[#allocation2 + $0x20] sm:$0xff]
    %v482 = vld [vmem:[#allocation2 + $0x28] sm:$0xff]
    %v483 = vld [vmem:[#allocation2 + $0x30] sm:$0xff]
    %v484 = vld [vmem:[#allocation2 + $0x38] sm:$0xff]
    %v485 = vld [vmem:[#allocation2 + $0x40] sm:$0xff]
    %v486 = vld [vmem:[#allocation2 + $0x48] sm:$0xff]
    %v487 = vld [vmem:[#allocation2 + $0x50] sm:$0xff]
    %v488 = vld [vmem:[#allocation2 + $0x58] sm:$0xff]
    %v489 = vld [vmem:[#allocation2 + $0x60] sm:$0xff]
    %v490 = vld [vmem:[#allocation2 + $0x68] sm:$0xff]
    %v491 = vld [vmem:[#allocation2 + $0x70] sm:$0xff]
    %v492 = vld [vmem:[#allocation2 + $0x78] sm:$0xff]
    %v493 = vld [vmem:[#allocation5] sm:$0xff]
    %v494 = vld [vmem:[#allocation5 + $0x8] sm:$0xff]
    %v495 = vld [vmem:[#allocation5 + $0x10] sm:$0xff]
    %v496 = vld [vmem:[#allocation5 + $0x18] sm:$0xff]
    %v497 = vld [vmem:[#allocation5 + $0x20] sm:$0xff]
    %v498 = vld [vmem:[#allocation5 + $0x28] sm:$0xff]
    %v499 = vld [vmem:[#allocation5 + $0x30] sm:$0xff]
    %v500 = vld [vmem:[#allocation5 + $0x38] sm:$0xff]
    %v501 = vld [vmem:[#allocation5 + $0x40] sm:$0xff]
    %v502 = vld [vmem:[#allocation5 + $0x48] sm:$0xff]
    %v503 = vld [vmem:[#allocation5 + $0x50] sm:$0xff]
    %v504 = vld [vmem:[#allocation5 + $0x58] sm:$0xff]
    %v505 = vld [vmem:[#allocation5 + $0x60] sm:$0xff]
    %v506 = vld [vmem:[#allocation5 + $0x68] sm:$0xff]
    %v507 = vld [vmem:[#allocation5 + $0x70] sm:$0xff]
    %v508 = vld [vmem:[#allocation5 + $0x78] sm:$0xff]
    %v509 = vld [vmem:[%s5] sm:$0x1]
    %v510 = vld [vmem:[%s7] sm:$0x1]
    %v512 = vlaneseq
    %v513 = vshrl.u32 %v512, 7
    %v514 = vsub.s32 0, %v513
    %v515 = vrot.slane %v509, %v514
    %517 = vmatprep.subr.mxu0 0.0
    %518 = vmatpush1.msra.mxu0 %v492
    %519 = vmatprep.subr.mxu0 0.0
    %520 = vmatpush1.msra.mxu0 %v491
    %521 = vmatprep.subr.mxu0 0.0
    %522 = vmatpush1.msra.mxu0 %v490
    %523 = vmatprep.subr.mxu0 0.0
    %524 = vmatpush1.msra.mxu0 %v489
    %525 = vmatprep.subr.mxu0 0.0
    %526 = vmatpush1.msra.mxu0 %v488
    %527 = vmatprep.subr.mxu0 0.0
    %528 = vmatpush1.msra.mxu0 %v487
    %529 = vmatprep.subr.mxu0 0.0
    %530 = vmatpush1.msra.mxu0 %v486
    %531 = vmatprep.subr.mxu0 0.0
    %532 = vmatpush1.msra.mxu0 %v485
    %533 = vmatprep.subr.mxu0 0.0
    %534 = vmatpush1.msra.mxu0 %v484
    %535 = vmatprep.subr.mxu0 0.0
    %536 = vmatpush1.msra.mxu0 %v483
    %537 = vmatprep.subr.mxu0 0.0
    %538 = vmatpush1.msra.mxu0 %v482
    %539 = vmatprep.subr.mxu0 0.0
    %540 = vmatpush1.msra.mxu0 %v481
    %541 = vmatprep.subr.mxu0 0.0
    %542 = vmatpush1.msra.mxu0 %v480
    %543 = vmatprep.subr.mxu0 0.0
    %544 = vmatpush1.msra.mxu0 %v479
    %545 = vmatprep.subr.mxu0 0.0
    %546 = vmatpush1.msra.mxu0 %v478
    %547 = vmatprep.subr.mxu0 0.0
    %548 = vmatpush1.msra.mxu0 %v477
    %549 = vmatprep.subr.mxu0 0.0
    %550 = vmatpush2.msra.mxu0 0.0
    %551 = vmatprep.subr.mxu0 0.0
    %552 = vmatpush2.msra.mxu0 0.0
    %553 = vmatprep.subr.mxu0 0.0
    %554 = vmatpush2.msra.mxu0 0.0
    %555 = vmatprep.subr.mxu0 0.0
    %556 = vmatpush2.msra.mxu0 0.0
    %557 = vmatprep.subr.mxu0 0.0
    %558 = vmatpush2.msra.mxu0 0.0
    %559 = vmatprep.subr.mxu0 0.0
    %560 = vmatpush2.msra.mxu0 0.0
    %561 = vmatprep.subr.mxu0 0.0
    %562 = vmatpush2.msra.mxu0 0.0
    %563 = vmatprep.subr.mxu0 0.0
    %564 = vmatpush2.msra.mxu0 0.0
    %565 = vmatprep.subr.mxu0 0.0
    %566 = vmatpush2.msra.mxu0 0.0
    %567 = vmatprep.subr.mxu0 0.0
    %568 = vmatpush2.msra.mxu0 0.0
    %569 = vmatprep.subr.mxu0 0.0
    %570 = vmatpush2.msra.mxu0 0.0
    %571 = vmatprep.subr.mxu0 0.0
    %572 = vmatpush2.msra.mxu0 0.0
    %573 = vmatprep.subr.mxu0 0.0
    %574 = vmatpush2.msra.mxu0 0.0
    %575 = vmatprep.subr.mxu0 0.0
    %576 = vmatpush2.msra.mxu0 0.0
    %577 = vmatprep.subr.mxu0 0.0
    %578 = vmatpush2.msra.mxu0 0.0
    %579 = vmatprep.subr.mxu0 0.0
    %580 = vmatpush2.msra.mxu0 0.0
    %581 = vmatprep.mubr.f32.mxu0 0.0
    %582 = vmatmul.mubr.f32.gmra.mxu0 %v461
    %v583 = vpop.f32.mrf.mxu0
    %v584 = vadd.f32 %v515, %v583
    %v585 = vpop.f32.mrf.mxu0
    %586 = vmatprep.mubr.f32.mxu0 0.0
    %587 = vmatmul.mubr.f32.gmra.mxu0 %v462
    %v588 = vpop.f32.mrf.mxu0
    %v589 = vadd.f32 %v515, %v588
    %v590 = vpop.f32.mrf.mxu0
    %591 = vmatprep.mubr.f32.mxu0 0.0
    %592 = vmatmul.mubr.f32.gmra.mxu0 %v463
    %v593 = vpop.f32.mrf.mxu0
    %v594 = vadd.f32 %v515, %v593
    %v595 = vpop.f32.mrf.mxu0
    %596 = vmatprep.mubr.f32.mxu0 0.0
    %597 = vmatmul.mubr.f32.gmra.mxu0 %v464
    %v598 = vpop.f32.mrf.mxu0
    %v599 = vadd.f32 %v515, %v598
    %v600 = vpop.f32.mrf.mxu0
    %601 = vmatprep.mubr.f32.mxu0 0.0
    %602 = vmatmul.mubr.f32.gmra.mxu0 %v465
    %v603 = vpop.f32.mrf.mxu0
    %v604 = vadd.f32 %v515, %v603
    %v605 = vpop.f32.mrf.mxu0
    %606 = vmatprep.mubr.f32.mxu0 0.0
    %607 = vmatmul.mubr.f32.gmra.mxu0 %v466
    %v608 = vpop.f32.mrf.mxu0
    %v609 = vadd.f32 %v515, %v608
    %v610 = vpop.f32.mrf.mxu0
    %611 = vmatprep.mubr.f32.mxu0 0.0
    %612 = vmatmul.mubr.f32.gmra.mxu0 %v467
    %v613 = vpop.f32.mrf.mxu0
    %v614 = vadd.f32 %v515, %v613
    %v615 = vpop.f32.mrf.mxu0
    %616 = vmatprep.mubr.f32.mxu0 0.0
    %617 = vmatmul.mubr.f32.gmra.mxu0 %v468
    %v618 = vpop.f32.mrf.mxu0
    %v619 = vadd.f32 %v515, %v618
    %v620 = vpop.f32.mrf.mxu0
    %621 = vmatprep.mubr.f32.mxu0 0.0
    %622 = vmatmul.mubr.f32.gmra.mxu0 %v469
    %v623 = vpop.f32.mrf.mxu0
    %v624 = vadd.f32 %v515, %v623
    %v625 = vpop.f32.mrf.mxu0
    %626 = vmatprep.mubr.f32.mxu0 0.0
    %627 = vmatmul.mubr.f32.gmra.mxu0 %v470
    %v628 = vpop.f32.mrf.mxu0
    %v629 = vadd.f32 %v515, %v628
    %v630 = vpop.f32.mrf.mxu0
    %631 = vmatprep.mubr.f32.mxu0 0.0
    %632 = vmatmul.mubr.f32.gmra.mxu0 %v471
    %v633 = vpop.f32.mrf.mxu0
    %v634 = vadd.f32 %v515, %v633
    %v635 = vpop.f32.mrf.mxu0
    %636 = vmatprep.mubr.f32.mxu0 0.0
    %637 = vmatmul.mubr.f32.gmra.mxu0 %v472
    %v638 = vpop.f32.mrf.mxu0
    %v639 = vadd.f32 %v515, %v638
    %v640 = vpop.f32.mrf.mxu0
    %641 = vmatprep.mubr.f32.mxu0 0.0
    %642 = vmatmul.mubr.f32.gmra.mxu0 %v473
    %v643 = vpop.f32.mrf.mxu0
    %v644 = vadd.f32 %v515, %v643
    %v645 = vpop.f32.mrf.mxu0
    %646 = vmatprep.mubr.f32.mxu0 0.0
    %647 = vmatmul.mubr.f32.gmra.mxu0 %v474
    %v648 = vpop.f32.mrf.mxu0
    %v649 = vadd.f32 %v515, %v648
    %v650 = vpop.f32.mrf.mxu0
    %651 = vmatprep.mubr.f32.mxu0 0.0
    %652 = vmatmul.mubr.f32.gmra.mxu0 %v475
    %v653 = vpop.f32.mrf.mxu0
    %v654 = vadd.f32 %v515, %v653
    %v655 = vpop.f32.mrf.mxu0
    %656 = vmatprep.mubr.f32.mxu0 0.0
    %657 = vmatmul.mubr.f32.gmra.mxu0 %v476
    %v658 = vpop.f32.mrf.mxu0
    %v659 = vadd.f32 %v515, %v658
    %v660 = vpop.f32.mrf.mxu0
    %661 = vdwg.mxu0
    %v662 = vtanh.pop %v584
    %v663 = vtanh.pop %v589
    %v664 = vtanh.pop %v594
    %v665 = vtanh.pop %v599
    %v666 = vtanh.pop %v604
    %v667 = vtanh.pop %v609
    %v668 = vtanh.pop %v614
    %v669 = vtanh.pop %v619
    %v670 = vtanh.pop %v624
    %v671 = vtanh.pop %v629
    %v672 = vtanh.pop %v634
    %v673 = vtanh.pop %v639
    %v674 = vtanh.pop %v644
    %v675 = vtanh.pop %v649
    %v676 = vtanh.pop %v654
    %v677 = vtanh.pop %v659
    %v679 = vlaneseq
    %v680 = vshrl.u32 %v679, 7
    %v681 = vsub.s32 0, %v680
    %v682 = vrot.slane %v510, %v681
    %684 = vmatprep.subr.mxu0 0.0
    %685 = vmatpush1.msra.mxu0 %v508
    %686 = vmatprep.subr.mxu0 0.0
    %687 = vmatpush1.msra.mxu0 %v507
    %688 = vmatprep.subr.mxu0 0.0
    %689 = vmatpush1.msra.mxu0 %v506
    %690 = vmatprep.subr.mxu0 0.0
    %691 = vmatpush1.msra.mxu0 %v505
    %692 = vmatprep.subr.mxu0 0.0
    %693 = vmatpush1.msra.mxu0 %v504
    %694 = vmatprep.subr.mxu0 0.0
    %695 = vmatpush1.msra.mxu0 %v503
    %696 = vmatprep.subr.mxu0 0.0
    %697 = vmatpush1.msra.mxu0 %v502
    %698 = vmatprep.subr.mxu0 0.0
    %699 = vmatpush1.msra.mxu0 %v501
    %700 = vmatprep.subr.mxu0 0.0
    %701 = vmatpush1.msra.mxu0 %v500
    %702 = vmatprep.subr.mxu0 0.0
    %703 = vmatpush1.msra.mxu0 %v499
    %704 = vmatprep.subr.mxu0 0.0
    %705 = vmatpush1.msra.mxu0 %v498
    %706 = vmatprep.subr.mxu0 0.0
    %707 = vmatpush1.msra.mxu0 %v497
    %708 = vmatprep.subr.mxu0 0.0
    %709 = vmatpush1.msra.mxu0 %v496
    %710 = vmatprep.subr.mxu0 0.0
    %711 = vmatpush1.msra.mxu0 %v495
    %712 = vmatprep.subr.mxu0 0.0
    %713 = vmatpush1.msra.mxu0 %v494
    %714 = vmatprep.subr.mxu0 0.0
    %715 = vmatpush1.msra.mxu0 %v493
    %716 = vmatprep.subr.mxu0 0.0
    %717 = vmatpush2.msra.mxu0 0.0
    %718 = vmatprep.subr.mxu0 0.0
    %719 = vmatpush2.msra.mxu0 0.0
    %720 = vmatprep.subr.mxu0 0.0
    %721 = vmatpush2.msra.mxu0 0.0
    %722 = vmatprep.subr.mxu0 0.0
    %723 = vmatpush2.msra.mxu0 0.0
    %724 = vmatprep.subr.mxu0 0.0
    %725 = vmatpush2.msra.mxu0 0.0
    %726 = vmatprep.subr.mxu0 0.0
    %727 = vmatpush2.msra.mxu0 0.0
    %728 = vmatprep.subr.mxu0 0.0
    %729 = vmatpush2.msra.mxu0 0.0
    %730 = vmatprep.subr.mxu0 0.0
    %731 = vmatpush2.msra.mxu0 0.0
    %732 = vmatprep.subr.mxu0 0.0
    %733 = vmatpush2.msra.mxu0 0.0
    %734 = vmatprep.subr.mxu0 0.0
    %735 = vmatpush2.msra.mxu0 0.0
    %736 = vmatprep.subr.mxu0 0.0
    %737 = vmatpush2.msra.mxu0 0.0
    %738 = vmatprep.subr.mxu0 0.0
    %739 = vmatpush2.msra.mxu0 0.0
    %740 = vmatprep.subr.mxu0 0.0
    %741 = vmatpush2.msra.mxu0 0.0
    %742 = vmatprep.subr.mxu0 0.0
    %743 = vmatpush2.msra.mxu0 0.0
    %744 = vmatprep.subr.mxu0 0.0
    %745 = vmatpush2.msra.mxu0 0.0
    %746 = vmatprep.subr.mxu0 0.0
    %747 = vmatpush2.msra.mxu0 0.0
    %748 = vmatprep.mubr.f32.mxu0 0.0
    %749 = vmatmul.mubr.f32.gmra.mxu0 %v662
    %v750 = vpop.f32.mrf.mxu0
    %v751 = vadd.f32 %v682, %v750
    %v752 = vpop.f32.mrf.mxu0
    %753 = vmatprep.mubr.f32.mxu0 0.0
    %754 = vmatmul.mubr.f32.gmra.mxu0 %v663
    %v755 = vpop.f32.mrf.mxu0
    %v756 = vadd.f32 %v682, %v755
    %v757 = vpop.f32.mrf.mxu0
    %758 = vmatprep.mubr.f32.mxu0 0.0
    %759 = vmatmul.mubr.f32.gmra.mxu0 %v664
    %v760 = vpop.f32.mrf.mxu0
    %v761 = vadd.f32 %v682, %v760
    %v762 = vpop.f32.mrf.mxu0
    %763 = vmatprep.mubr.f32.mxu0 0.0
    %764 = vmatmul.mubr.f32.gmra.mxu0 %v665
    %v765 = vpop.f32.mrf.mxu0
    %v766 = vadd.f32 %v682, %v765
    %v767 = vpop.f32.mrf.mxu0
    %768 = vmatprep.mubr.f32.mxu0 0.0
    %769 = vmatmul.mubr.f32.gmra.mxu0 %v666
    %v770 = vpop.f32.mrf.mxu0
    %v771 = vadd.f32 %v682, %v770
    %v772 = vpop.f32.mrf.mxu0
    %773 = vmatprep.mubr.f32.mxu0 0.0
    %774 = vmatmul.mubr.f32.gmra.mxu0 %v667
    %v775 = vpop.f32.mrf.mxu0
    %v776 = vadd.f32 %v682, %v775
    %v777 = vpop.f32.mrf.mxu0
    %778 = vmatprep.mubr.f32.mxu0 0.0
    %779 = vmatmul.mubr.f32.gmra.mxu0 %v668
    %v780 = vpop.f32.mrf.mxu0
    %v781 = vadd.f32 %v682, %v780
    %v782 = vpop.f32.mrf.mxu0
    %783 = vmatprep.mubr.f32.mxu0 0.0
    %784 = vmatmul.mubr.f32.gmra.mxu0 %v669
    %v785 = vpop.f32.mrf.mxu0
    %v786 = vadd.f32 %v682, %v785
    %v787 = vpop.f32.mrf.mxu0
    %788 = vmatprep.mubr.f32.mxu0 0.0
    %789 = vmatmul.mubr.f32.gmra.mxu0 %v670
    %v790 = vpop.f32.mrf.mxu0
    %v791 = vadd.f32 %v682, %v790
    %v792 = vpop.f32.mrf.mxu0
    %793 = vmatprep.mubr.f32.mxu0 0.0
    %794 = vmatmul.mubr.f32.gmra.mxu0 %v671
    %v795 = vpop.f32.mrf.mxu0
    %v796 = vadd.f32 %v682, %v795
    %v797 = vpop.f32.mrf.mxu0
    %798 = vmatprep.mubr.f32.mxu0 0.0
    %799 = vmatmul.mubr.f32.gmra.mxu0 %v672
    %v800 = vpop.f32.mrf.mxu0
    %v801 = vadd.f32 %v682, %v800
    %v802 = vpop.f32.mrf.mxu0
    %803 = vmatprep.mubr.f32.mxu0 0.0
    %804 = vmatmul.mubr.f32.gmra.mxu0 %v673
    %v805 = vpop.f32.mrf.mxu0
    %v806 = vadd.f32 %v682, %v805
    %v807 = vpop.f32.mrf.mxu0
    %808 = vmatprep.mubr.f32.mxu0 0.0
    %809 = vmatmul.mubr.f32.gmra.mxu0 %v674
    %v810 = vpop.f32.mrf.mxu0
    %v811 = vadd.f32 %v682, %v810
    %v812 = vpop.f32.mrf.mxu0
    %813 = vmatprep.mubr.f32.mxu0 0.0
    %814 = vmatmul.mubr.f32.gmra.mxu0 %v675
    %v815 = vpop.f32.mrf.mxu0
    %v816 = vadd.f32 %v682, %v815
    %v817 = vpop.f32.mrf.mxu0
    %818 = vmatprep.mubr.f32.mxu0 0.0
    %819 = vmatmul.mubr.f32.gmra.mxu0 %v676
    %v820 = vpop.f32.mrf.mxu0
    %v821 = vadd.f32 %v682, %v820
    %v822 = vpop.f32.mrf.mxu0
    %823 = vmatprep.mubr.f32.mxu0 0.0
    %824 = vmatmul.mubr.f32.gmra.mxu0 %v677
    %v825 = vpop.f32.mrf.mxu0
    %v826 = vadd.f32 %v682, %v825
    %v827 = vpop.f32.mrf.mxu0
    %828 = vdwg.mxu0
    %v829 = vadd.f32 %v461, %v751
    %v830 = vadd.f32 %v462, %v756
    %v831 = vadd.f32 %v463, %v761
    %v832 = vadd.f32 %v464, %v766
    %v833 = vadd.f32 %v465, %v771
    %v834 = vadd.f32 %v466, %v776
    %v835 = vadd.f32 %v467, %v781
    %v836 = vadd.f32 %v468, %v786
    %v837 = vadd.f32 %v469, %v791
    %v838 = vadd.f32 %v470, %v796
    %v839 = vadd.f32 %v471, %v801
    %v840 = vadd.f32 %v472, %v806
    %v841 = vadd.f32 %v473, %v811
    %v842 = vadd.f32 %v474, %v816
    %v843 = vadd.f32 %v475, %v821
    %v844 = vadd.f32 %v476, %v826
    %845 = vmatprep.subr.mxu0 0.0
    %846 = vmatpush1.msra.mxu0 %v492
    %847 = vmatprep.subr.mxu0 0.0
    %848 = vmatpush1.msra.mxu0 %v491
    %849 = vmatprep.subr.mxu0 0.0
    %850 = vmatpush1.msra.mxu0 %v490
    %851 = vmatprep.subr.mxu0 0.0
    %852 = vmatpush1.msra.mxu0 %v489
    %853 = vmatprep.subr.mxu0 0.0
    %854 = vmatpush1.msra.mxu0 %v488
    %855 = vmatprep.subr.mxu0 0.0
    %856 = vmatpush1.msra.mxu0 %v487
    %857 = vmatprep.subr.mxu0 0.0
    %858 = vmatpush1.msra.mxu0 %v486
    %859 = vmatprep.subr.mxu0 0.0
    %860 = vmatpush1.msra.mxu0 %v485
    %861 = vmatprep.subr.mxu0 0.0
    %862 = vmatpush1.msra.mxu0 %v484
    %863 = vmatprep.subr.mxu0 0.0
    %864 = vmatpush1.msra.mxu0 %v483
    %865 = vmatprep.subr.mxu0 0.0
    %866 = vmatpush1.msra.mxu0 %v482
    %867 = vmatprep.subr.mxu0 0.0
    %868 = vmatpush1.msra.mxu0 %v481
    %869 = vmatprep.subr.mxu0 0.0
    %870 = vmatpush1.msra.mxu0 %v480
    %871 = vmatprep.subr.mxu0 0.0
    %872 = vmatpush1.msra.mxu0 %v479
    %873 = vmatprep.subr.mxu0 0.0
    %874 = vmatpush1.msra.mxu0 %v478
    %875 = vmatprep.subr.mxu0 0.0
    %876 = vmatpush1.msra.mxu0 %v477
    %877 = vmatprep.subr.mxu0 0.0
    %878 = vmatpush2.msra.mxu0 0.0
    %879 = vmatprep.subr.mxu0 0.0
    %880 = vmatpush2.msra.mxu0 0.0
    %881 = vmatprep.subr.mxu0 0.0
    %882 = vmatpush2.msra.mxu0 0.0
    %883 = vmatprep.subr.mxu0 0.0
    %884 = vmatpush2.msra.mxu0 0.0
    %885 = vmatprep.subr.mxu0 0.0
    %886 = vmatpush2.msra.mxu0 0.0
    %887 = vmatprep.subr.mxu0 0.0
    %888 = vmatpush2.msra.mxu0 0.0
    %889 = vmatprep.subr.mxu0 0.0
    %890 = vmatpush2.msra.mxu0 0.0
    %891 = vmatprep.subr.mxu0 0.0
    %892 = vmatpush2.msra.mxu0 0.0
    %893 = vmatprep.subr.mxu0 0.0
    %894 = vmatpush2.msra.mxu0 0.0
    %895 = vmatprep.subr.mxu0 0.0
    %896 = vmatpush2.msra.mxu0 0.0
    %897 = vmatprep.subr.mxu0 0.0
    %898 = vmatpush2.msra.mxu0 0.0
    %899 = vmatprep.subr.mxu0 0.0
    %900 = vmatpush2.msra.mxu0 0.0
    %901 = vmatprep.subr.mxu0 0.0
    %902 = vmatpush2.msra.mxu0 0.0
    %903 = vmatprep.subr.mxu0 0.0
    %904 = vmatpush2.msra.mxu0 0.0
    %905 = vmatprep.subr.mxu0 0.0
    %906 = vmatpush2.msra.mxu0 0.0
    %907 = vmatprep.subr.mxu0 0.0
    %908 = vmatpush2.msra.mxu0 0.0
    %909 = vmatprep.mubr.f32.mxu0 0.0
    %910 = vmatmul.mubr.f32.gmra.mxu0 %v829
    %v911 = vpop.f32.mrf.mxu0
    %v912 = vadd.f32 %v515, %v911
    %v913 = vpop.f32.mrf.mxu0
    %914 = vmatprep.mubr.f32.mxu0 0.0
    %915 = vmatmul.mubr.f32.gmra.mxu0 %v830
    %v916 = vpop.f32.mrf.mxu0
    %v917 = vadd.f32 %v515, %v916
    %v918 = vpop.f32.mrf.mxu0
    %919 = vmatprep.mubr.f32.mxu0 0.0
    %920 = vmatmul.mubr.f32.gmra.mxu0 %v831
    %v921 = vpop.f32.mrf.mxu0
    %v922 = vadd.f32 %v515, %v921
    %v923 = vpop.f32.mrf.mxu0
    %924 = vmatprep.mubr.f32.mxu0 0.0
    %925 = vmatmul.mubr.f32.gmra.mxu0 %v832
    %v926 = vpop.f32.mrf.mxu0
    %v927 = vadd.f32 %v515, %v926
    %v928 = vpop.f32.mrf.mxu0
    %929 = vmatprep.mubr.f32.mxu0 0.0
    %930 = vmatmul.mubr.f32.gmra.mxu0 %v833
    %v931 = vpop.f32.mrf.mxu0
    %v932 = vadd.f32 %v515, %v931
    %v933 = vpop.f32.mrf.mxu0
    %934 = vmatprep.mubr.f32.mxu0 0.0
    %935 = vmatmul.mubr.f32.gmra.mxu0 %v834
    %v936 = vpop.f32.mrf.mxu0
    %v937 = vadd.f32 %v515, %v936
    %v938 = vpop.f32.mrf.mxu0
    %939 = vmatprep.mubr.f32.mxu0 0.0
    %940 = vmatmul.mubr.f32.gmra.mxu0 %v835
    %v941 = vpop.f32.mrf.mxu0
    %v942 = vadd.f32 %v515, %v941
    %v943 = vpop.f32.mrf.mxu0
    %944 = vmatprep.mubr.f32.mxu0 0.0
    %945 = vmatmul.mubr.f32.gmra.mxu0 %v836
    %v946 = vpop.f32.mrf.mxu0
    %v947 = vadd.f32 %v515, %v946
    %v948 = vpop.f32.mrf.mxu0
    %949 = vmatprep.mubr.f32.mxu0 0.0
    %950 = vmatmul.mubr.f32.gmra.mxu0 %v837
    %v951 = vpop.f32.mrf.mxu0
    %v952 = vadd.f32 %v515, %v951
    %v953 = vpop.f32.mrf.mxu0
    %954 = vmatprep.mubr.f32.mxu0 0.0
    %955 = vmatmul.mubr.f32.gmra.mxu0 %v838
    %v956 = vpop.f32.mrf.mxu0
    %v957 = vadd.f32 %v515, %v956
    %v958 = vpop.f32.mrf.mxu0
    %959 = vmatprep.mubr.f32.mxu0 0.0
    %960 = vmatmul.mubr.f32.gmra.mxu0 %v839
    %v961 = vpop.f32.mrf.mxu0
    %v962 = vadd.f32 %v515, %v961
    %v963 = vpop.f32.mrf.mxu0
    %964 = vmatprep.mubr.f32.mxu0 0.0
    %965 = vmatmul.mubr.f32.gmra.mxu0 %v840
    %v966 = vpop.f32.mrf.mxu0
    %v967 = vadd.f32 %v515, %v966
    %v968 = vpop.f32.mrf.mxu0
    %969 = vmatprep.mubr.f32.mxu0 0.0
    %970 = vmatmul.mubr.f32.gmra.mxu0 %v841
    %v971 = vpop.f32.mrf.mxu0
    %v972 = vadd.f32 %v515, %v971
    %v973 = vpop.f32.mrf.mxu0
    %974 = vmatprep.mubr.f32.mxu0 0.0
    %975 = vmatmul.mubr.f32.gmra.mxu0 %v842
    %v976 = vpop.f32.mrf.mxu0
    %v977 = vadd.f32 %v515, %v976
    %v978 = vpop.f32.mrf.mxu0
    %979 = vmatprep.mubr.f32.mxu0 0.0
    %980 = vmatmul.mubr.f32.gmra.mxu0 %v843
    %v981 = vpop.f32.mrf.mxu0
    %v982 = vadd.f32 %v515, %v981
    %v983 = vpop.f32.mrf.mxu0
    %984 = vmatprep.mubr.f32.mxu0 0.0
    %985 = vmatmul.mubr.f32.gmra.mxu0 %v844
    %v986 = vpop.f32.mrf.mxu0
    %v987 = vadd.f32 %v515, %v986
    %v988 = vpop.f32.mrf.mxu0
    %989 = vdwg.mxu0
    %v990 = vtanh.pop %v912
    %v991 = vtanh.pop %v917
    %v992 = vtanh.pop %v922
    %v993 = vtanh.pop %v927
    %v994 = vtanh.pop %v932
    %v995 = vtanh.pop %v937
    %v996 = vtanh.pop %v942
    %v997 = vtanh.pop %v947
    %v998 = vtanh.pop %v952
    %v999 = vtanh.pop %v957
    %v1000 = vtanh.pop %v962
    %v1001 = vtanh.pop %v967
    %v1002 = vtanh.pop %v972
    %v1003 = vtanh.pop %v977
    %v1004 = vtanh.pop %v982
    %v1005 = vtanh.pop %v987
    %1006 = vmatprep.subr.mxu0 0.0
    %1007 = vmatpush1.msra.mxu0 %v508
    %1008 = vmatprep.subr.mxu0 0.0
    %1009 = vmatpush1.msra.mxu0 %v507
    %1010 = vmatprep.subr.mxu0 0.0
    %1011 = vmatpush1.msra.mxu0 %v506
    %1012 = vmatprep.subr.mxu0 0.0
    %1013 = vmatpush1.msra.mxu0 %v505
    %1014 = vmatprep.subr.mxu0 0.0
    %1015 = vmatpush1.msra.mxu0 %v504
    %1016 = vmatprep.subr.mxu0 0.0
    %1017 = vmatpush1.msra.mxu0 %v503
    %1018 = vmatprep.subr.mxu0 0.0
    %1019 = vmatpush1.msra.mxu0 %v502
    %1020 = vmatprep.subr.mxu0 0.0
    %1021 = vmatpush1.msra.mxu0 %v501
    %1022 = vmatprep.subr.mxu0 0.0
    %1023 = vmatpush1.msra.mxu0 %v500
    %1024 = vmatprep.subr.mxu0 0.0
    %1025 = vmatpush1.msra.mxu0 %v499
    %1026 = vmatprep.subr.mxu0 0.0
    %1027 = vmatpush1.msra.mxu0 %v498
    %1028 = vmatprep.subr.mxu0 0.0
    %1029 = vmatpush1.msra.mxu0 %v497
    %1030 = vmatprep.subr.mxu0 0.0
    %1031 = vmatpush1.msra.mxu0 %v496
    %1032 = vmatprep.subr.mxu0 0.0
    %1033 = vmatpush1.msra.mxu0 %v495
    %1034 = vmatprep.subr.mxu0 0.0
    %1035 = vmatpush1.msra.mxu0 %v494
    %1036 = vmatprep.subr.mxu0 0.0
    %1037 = vmatpush1.msra.mxu0 %v493
    %1038 = vmatprep.subr.mxu0 0.0
    %1039 = vmatpush2.msra.mxu0 0.0
    %1040 = vmatprep.subr.mxu0 0.0
    %1041 = vmatpush2.msra.mxu0 0.0
    %1042 = vmatprep.subr.mxu0 0.0
    %1043 = vmatpush2.msra.mxu0 0.0
    %1044 = vmatprep.subr.mxu0 0.0
    %1045 = vmatpush2.msra.mxu0 0.0
    %1046 = vmatprep.subr.mxu0 0.0
    %1047 = vmatpush2.msra.mxu0 0.0
    %1048 = vmatprep.subr.mxu0 0.0
    %1049 = vmatpush2.msra.mxu0 0.0
    %1050 = vmatprep.subr.mxu0 0.0
    %1051 = vmatpush2.msra.mxu0 0.0
    %1052 = vmatprep.subr.mxu0 0.0
    %1053 = vmatpush2.msra.mxu0 0.0
    %1054 = vmatprep.subr.mxu0 0.0
    %1055 = vmatpush2.msra.mxu0 0.0
    %1056 = vmatprep.subr.mxu0 0.0
    %1057 = vmatpush2.msra.mxu0 0.0
    %1058 = vmatprep.subr.mxu0 0.0
    %1059 = vmatpush2.msra.mxu0 0.0
    %1060 = vmatprep.subr.mxu0 0.0
    %1061 = vmatpush2.msra.mxu0 0.0
    %1062 = vmatprep.subr.mxu0 0.0
    %1063 = vmatpush2.msra.mxu0 0.0
    %1064 = vmatprep.subr.mxu0 0.0
    %1065 = vmatpush2.msra.mxu0 0.0
    %1066 = vmatprep.subr.mxu0 0.0
    %1067 = vmatpush2.msra.mxu0 0.0
    %1068 = vmatprep.subr.mxu0 0.0
    %1069 = vmatpush2.msra.mxu0 0.0
    %1070 = vmatprep.mubr.f32.mxu0 0.0
    %1071 = vmatmul.mubr.f32.gmra.mxu0 %v990
    %v1072 = vpop.f32.mrf.mxu0
    %v1073 = vadd.f32 %v682, %v1072
    %v1074 = vpop.f32.mrf.mxu0
    %1075 = vmatprep.mubr.f32.mxu0 0.0
    %1076 = vmatmul.mubr.f32.gmra.mxu0 %v991
    %v1077 = vpop.f32.mrf.mxu0
    %v1078 = vadd.f32 %v682, %v1077
    %v1079 = vpop.f32.mrf.mxu0
    %1080 = vmatprep.mubr.f32.mxu0 0.0
    %1081 = vmatmul.mubr.f32.gmra.mxu0 %v992
    %v1082 = vpop.f32.mrf.mxu0
    %v1083 = vadd.f32 %v682, %v1082
    %v1084 = vpop.f32.mrf.mxu0
    %1085 = vmatprep.mubr.f32.mxu0 0.0
    %1086 = vmatmul.mubr.f32.gmra.mxu0 %v993
    %v1087 = vpop.f32.mrf.mxu0
    %v1088 = vadd.f32 %v682, %v1087
    %v1089 = vpop.f32.mrf.mxu0
    %1090 = vmatprep.mubr.f32.mxu0 0.0
    %1091 = vmatmul.mubr.f32.gmra.mxu0 %v994
    %v1092 = vpop.f32.mrf.mxu0
    %v1093 = vadd.f32 %v682, %v1092
    %v1094 = vpop.f32.mrf.mxu0
    %1095 = vmatprep.mubr.f32.mxu0 0.0
    %1096 = vmatmul.mubr.f32.gmra.mxu0 %v995
    %v1097 = vpop.f32.mrf.mxu0
    %v1098 = vadd.f32 %v682, %v1097
    %v1099 = vpop.f32.mrf.mxu0
    %1100 = vmatprep.mubr.f32.mxu0 0.0
    %1101 = vmatmul.mubr.f32.gmra.mxu0 %v996
    %v1102 = vpop.f32.mrf.mxu0
    %v1103 = vadd.f32 %v682, %v1102
    %v1104 = vpop.f32.mrf.mxu0
    %1105 = vmatprep.mubr.f32.mxu0 0.0
    %1106 = vmatmul.mubr.f32.gmra.mxu0 %v997
    %v1107 = vpop.f32.mrf.mxu0
    %v1108 = vadd.f32 %v682, %v1107
    %v1109 = vpop.f32.mrf.mxu0
    %1110 = vmatprep.mubr.f32.mxu0 0.0
    %1111 = vmatmul.mubr.f32.gmra.mxu0 %v998
    %v1112 = vpop.f32.mrf.mxu0
    %v1113 = vadd.f32 %v682, %v1112
    %v1114 = vpop.f32.mrf.mxu0
    %1115 = vmatprep.mubr.f32.mxu0 0.0
    %1116 = vmatmul.mubr.f32.gmra.mxu0 %v999
    %v1117 = vpop.f32.mrf.mxu0
    %v1118 = vadd.f32 %v682, %v1117
    %v1119 = vpop.f32.mrf.mxu0
    %1120 = vmatprep.mubr.f32.mxu0 0.0
    %1121 = vmatmul.mubr.f32.gmra.mxu0 %v1000
    %v1122 = vpop.f32.mrf.mxu0
    %v1123 = vadd.f32 %v682, %v1122
    %v1124 = vpop.f32.mrf.mxu0
    %1125 = vmatprep.mubr.f32.mxu0 0.0
    %1126 = vmatmul.mubr.f32.gmra.mxu0 %v1001
    %v1127 = vpop.f32.mrf.mxu0
    %v1128 = vadd.f32 %v682, %v1127
    %v1129 = vpop.f32.mrf.mxu0
    %1130 = vmatprep.mubr.f32.mxu0 0.0
    %1131 = vmatmul.mubr.f32.gmra.mxu0 %v1002
    %v1132 = vpop.f32.mrf.mxu0
    %v1133 = vadd.f32 %v682, %v1132
    %v1134 = vpop.f32.mrf.mxu0
    %1135 = vmatprep.mubr.f32.mxu0 0.0
    %1136 = vmatmul.mubr.f32.gmra.mxu0 %v1003
    %v1137 = vpop.f32.mrf.mxu0
    %v1138 = vadd.f32 %v682, %v1137
    %v1139 = vpop.f32.mrf.mxu0
    %1140 = vmatprep.mubr.f32.mxu0 0.0
    %1141 = vmatmul.mubr.f32.gmra.mxu0 %v1004
    %v1142 = vpop.f32.mrf.mxu0
    %v1143 = vadd.f32 %v682, %v1142
    %v1144 = vpop.f32.mrf.mxu0
    %1145 = vmatprep.mubr.f32.mxu0 0.0
    %1146 = vmatmul.mubr.f32.gmra.mxu0 %v1005
    %v1147 = vpop.f32.mrf.mxu0
    %v1148 = vadd.f32 %v682, %v1147
    %v1149 = vpop.f32.mrf.mxu0
    %1150 = vdwg.mxu0
    %v1151 = vadd.f32 %v829, %v1073
    %v1152 = vadd.f32 %v830, %v1078
    %v1153 = vadd.f32 %v831, %v1083
    %v1154 = vadd.f32 %v832, %v1088
    %v1155 = vadd.f32 %v833, %v1093
    %v1156 = vadd.f32 %v834, %v1098
    %v1157 = vadd.f32 %v835, %v1103
    %v1158 = vadd.f32 %v836, %v1108
    %v1159 = vadd.f32 %v837, %v1113
    %v1160 = vadd.f32 %v838, %v1118
    %v1161 = vadd.f32 %v839, %v1123
    %v1162 = vadd.f32 %v840, %v1128
    %v1163 = vadd.f32 %v841, %v1133
    %v1164 = vadd.f32 %v842, %v1138
    %v1165 = vadd.f32 %v843, %v1143
    %v1166 = vadd.f32 %v844, %v1148
    %1167 = vmatprep.subr.mxu0 0.0
    %1168 = vmatpush1.msra.mxu0 %v492
    %1169 = vmatprep.subr.mxu0 0.0
    %1170 = vmatpush1.msra.mxu0 %v491
    %1171 = vmatprep.subr.mxu0 0.0
    %1172 = vmatpush1.msra.mxu0 %v490
    %1173 = vmatprep.subr.mxu0 0.0
    %1174 = vmatpush1.msra.mxu0 %v489
    %1175 = vmatprep.subr.mxu0 0.0
    %1176 = vmatpush1.msra.mxu0 %v488
    %1177 = vmatprep.subr.mxu0 0.0
    %1178 = vmatpush1.msra.mxu0 %v487
    %1179 = vmatprep.subr.mxu0 0.0
    %1180 = vmatpush1.msra.mxu0 %v486
    %1181 = vmatprep.subr.mxu0 0.0
    %1182 = vmatpush1.msra.mxu0 %v485
    %1183 = vmatprep.subr.mxu0 0.0
    %1184 = vmatpush1.msra.mxu0 %v484
    %1185 = vmatprep.subr.mxu0 0.0
    %1186 = vmatpush1.msra.mxu0 %v483
    %1187 = vmatprep.subr.mxu0 0.0
    %1188 = vmatpush1.msra.mxu0 %v482
    %1189 = vmatprep.subr.mxu0 0.0
    %1190 = vmatpush1.msra.mxu0 %v481
    %1191 = vmatprep.subr.mxu0 0.0
    %1192 = vmatpush1.msra.mxu0 %v480
    %1193 = vmatprep.subr.mxu0 0.0
    %1194 = vmatpush1.msra.mxu0 %v479
    %1195 = vmatprep.subr.mxu0 0.0
    %1196 = vmatpush1.msra.mxu0 %v478
    %1197 = vmatprep.subr.mxu0 0.0
    %1198 = vmatpush1.msra.mxu0 %v477
    %1199 = vmatprep.subr.mxu0 0.0
    %1200 = vmatpush2.msra.mxu0 0.0
    %1201 = vmatprep.subr.mxu0 0.0
    %1202 = vmatpush2.msra.mxu0 0.0
    %1203 = vmatprep.subr.mxu0 0.0
    %1204 = vmatpush2.msra.mxu0 0.0
    %1205 = vmatprep.subr.mxu0 0.0
    %1206 = vmatpush2.msra.mxu0 0.0
    %1207 = vmatprep.subr.mxu0 0.0
    %1208 = vmatpush2.msra.mxu0 0.0
    %1209 = vmatprep.subr.mxu0 0.0
    %1210 = vmatpush2.msra.mxu0 0.0
    %1211 = vmatprep.subr.mxu0 0.0
    %1212 = vmatpush2.msra.mxu0 0.0
    %1213 = vmatprep.subr.mxu0 0.0
    %1214 = vmatpush2.msra.mxu0 0.0
    %1215 = vmatprep.subr.mxu0 0.0
    %1216 = vmatpush2.msra.mxu0 0.0
    %1217 = vmatprep.subr.mxu0 0.0
    %1218 = vmatpush2.msra.mxu0 0.0
    %1219 = vmatprep.subr.mxu0 0.0
    %1220 = vmatpush2.msra.mxu0 0.0
    %1221 = vmatprep.subr.mxu0 0.0
    %1222 = vmatpush2.msra.mxu0 0.0
    %1223 = vmatprep.subr.mxu0 0.0
    %1224 = vmatpush2.msra.mxu0 0.0
    %1225 = vmatprep.subr.mxu0 0.0
    %1226 = vmatpush2.msra.mxu0 0.0
    %1227 = vmatprep.subr.mxu0 0.0
    %1228 = vmatpush2.msra.mxu0 0.0
    %1229 = vmatprep.subr.mxu0 0.0
    %1230 = vmatpush2.msra.mxu0 0.0
    %1231 = vmatprep.mubr.f32.mxu0 0.0
    %1232 = vmatmul.mubr.f32.gmra.mxu0 %v1151
    %v1233 = vpop.f32.mrf.mxu0
    %v1234 = vadd.f32 %v515, %v1233
    %v1235 = vpop.f32.mrf.mxu0
    %1236 = vmatprep.mubr.f32.mxu0 0.0
    %1237 = vmatmul.mubr.f32.gmra.mxu0 %v1152
    %v1238 = vpop.f32.mrf.mxu0
    %v1239 = vadd.f32 %v515, %v1238
    %v1240 = vpop.f32.mrf.mxu0
    %1241 = vmatprep.mubr.f32.mxu0 0.0
    %1242 = vmatmul.mubr.f32.gmra.mxu0 %v1153
    %v1243 = vpop.f32.mrf.mxu0
    %v1244 = vadd.f32 %v515, %v1243
    %v1245 = vpop.f32.mrf.mxu0
    %1246 = vmatprep.mubr.f32.mxu0 0.0
    %1247 = vmatmul.mubr.f32.gmra.mxu0 %v1154
    %v1248 = vpop.f32.mrf.mxu0
    %v1249 = vadd.f32 %v515, %v1248
    %v1250 = vpop.f32.mrf.mxu0
    %1251 = vmatprep.mubr.f32.mxu0 0.0
    %1252 = vmatmul.mubr.f32.gmra.mxu0 %v1155
    %v1253 = vpop.f32.mrf.mxu0
    %v1254 = vadd.f32 %v515, %v1253
    %v1255 = vpop.f32.mrf.mxu0
    %1256 = vmatprep.mubr.f32.mxu0 0.0
    %1257 = vmatmul.mubr.f32.gmra.mxu0 %v1156
    %v1258 = vpop.f32.mrf.mxu0
    %v1259 = vadd.f32 %v515, %v1258
    %v1260 = vpop.f32.mrf.mxu0
    %1261 = vmatprep.mubr.f32.mxu0 0.0
    %1262 = vmatmul.mubr.f32.gmra.mxu0 %v1157
    %v1263 = vpop.f32.mrf.mxu0
    %v1264 = vadd.f32 %v515, %v1263
    %v1265 = vpop.f32.mrf.mxu0
    %1266 = vmatprep.mubr.f32.mxu0 0.0
    %1267 = vmatmul.mubr.f32.gmra.mxu0 %v1158
    %v1268 = vpop.f32.mrf.mxu0
    %v1269 = vadd.f32 %v515, %v1268
    %v1270 = vpop.f32.mrf.mxu0
    %1271 = vmatprep.mubr.f32.mxu0 0.0
    %1272 = vmatmul.mubr.f32.gmra.mxu0 %v1159
    %v1273 = vpop.f32.mrf.mxu0
    %v1274 = vadd.f32 %v515, %v1273
    %v1275 = vpop.f32.mrf.mxu0
    %1276 = vmatprep.mubr.f32.mxu0 0.0
    %1277 = vmatmul.mubr.f32.gmra.mxu0 %v1160
    %v1278 = vpop.f32.mrf.mxu0
    %v1279 = vadd.f32 %v515, %v1278
    %v1280 = vpop.f32.mrf.mxu0
    %1281 = vmatprep.mubr.f32.mxu0 0.0
    %1282 = vmatmul.mubr.f32.gmra.mxu0 %v1161
    %v1283 = vpop.f32.mrf.mxu0
    %v1284 = vadd.f32 %v515, %v1283
    %v1285 = vpop.f32.mrf.mxu0
    %1286 = vmatprep.mubr.f32.mxu0 0.0
    %1287 = vmatmul.mubr.f32.gmra.mxu0 %v1162
    %v1288 = vpop.f32.mrf.mxu0
    %v1289 = vadd.f32 %v515, %v1288
    %v1290 = vpop.f32.mrf.mxu0
    %1291 = vmatprep.mubr.f32.mxu0 0.0
    %1292 = vmatmul.mubr.f32.gmra.mxu0 %v1163
    %v1293 = vpop.f32.mrf.mxu0
    %v1294 = vadd.f32 %v515, %v1293
    %v1295 = vpop.f32.mrf.mxu0
    %1296 = vmatprep.mubr.f32.mxu0 0.0
    %1297 = vmatmul.mubr.f32.gmra.mxu0 %v1164
    %v1298 = vpop.f32.mrf.mxu0
    %v1299 = vadd.f32 %v515, %v1298
    %v1300 = vpop.f32.mrf.mxu0
    %1301 = vmatprep.mubr.f32.mxu0 0.0
    %1302 = vmatmul.mubr.f32.gmra.mxu0 %v1165
    %v1303 = vpop.f32.mrf.mxu0
    %v1304 = vadd.f32 %v515, %v1303
    %v1305 = vpop.f32.mrf.mxu0
    %1306 = vmatprep.mubr.f32.mxu0 0.0
    %1307 = vmatmul.mubr.f32.gmra.mxu0 %v1166
    %v1308 = vpop.f32.mrf.mxu0
    %v1309 = vadd.f32 %v515, %v1308
    %v1310 = vpop.f32.mrf.mxu0
    %1311 = vdwg.mxu0
    %v1312 = vtanh.pop %v1234
    %v1313 = vtanh.pop %v1239
    %v1314 = vtanh.pop %v1244
    %v1315 = vtanh.pop %v1249
    %v1316 = vtanh.pop %v1254
    %v1317 = vtanh.pop %v1259
    %v1318 = vtanh.pop %v1264
    %v1319 = vtanh.pop %v1269
    %v1320 = vtanh.pop %v1274
    %v1321 = vtanh.pop %v1279
    %v1322 = vtanh.pop %v1284
    %v1323 = vtanh.pop %v1289
    %v1324 = vtanh.pop %v1294
    %v1325 = vtanh.pop %v1299
    %v1326 = vtanh.pop %v1304
    %v1327 = vtanh.pop %v1309
    %1328 = vmatprep.subr.mxu0 0.0
    %1329 = vmatpush1.msra.mxu0 %v508
    %1330 = vmatprep.subr.mxu0 0.0
    %1331 = vmatpush1.msra.mxu0 %v507
    %1332 = vmatprep.subr.mxu0 0.0
    %1333 = vmatpush1.msra.mxu0 %v506
    %1334 = vmatprep.subr.mxu0 0.0
    %1335 = vmatpush1.msra.mxu0 %v505
    %1336 = vmatprep.subr.mxu0 0.0
    %1337 = vmatpush1.msra.mxu0 %v504
    %1338 = vmatprep.subr.mxu0 0.0
    %1339 = vmatpush1.msra.mxu0 %v503
    %1340 = vmatprep.subr.mxu0 0.0
    %1341 = vmatpush1.msra.mxu0 %v502
    %1342 = vmatprep.subr.mxu0 0.0
    %1343 = vmatpush1.msra.mxu0 %v501
    %1344 = vmatprep.subr.mxu0 0.0
    %1345 = vmatpush1.msra.mxu0 %v500
    %1346 = vmatprep.subr.mxu0 0.0
    %1347 = vmatpush1.msra.mxu0 %v499
    %1348 = vmatprep.subr.mxu0 0.0
    %1349 = vmatpush1.msra.mxu0 %v498
    %1350 = vmatprep.subr.mxu0 0.0
    %1351 = vmatpush1.msra.mxu0 %v497
    %1352 = vmatprep.subr.mxu0 0.0
    %1353 = vmatpush1.msra.mxu0 %v496
    %1354 = vmatprep.subr.mxu0 0.0
    %1355 = vmatpush1.msra.mxu0 %v495
    %1356 = vmatprep.subr.mxu0 0.0
    %1357 = vmatpush1.msra.mxu0 %v494
    %1358 = vmatprep.subr.mxu0 0.0
    %1359 = vmatpush1.msra.mxu0 %v493
    %1360 = vmatprep.subr.mxu0 0.0
    %1361 = vmatpush2.msra.mxu0 0.0
    %1362 = vmatprep.subr.mxu0 0.0
    %1363 = vmatpush2.msra.mxu0 0.0
    %1364 = vmatprep.subr.mxu0 0.0
    %1365 = vmatpush2.msra.mxu0 0.0
    %1366 = vmatprep.subr.mxu0 0.0
    %1367 = vmatpush2.msra.mxu0 0.0
    %1368 = vmatprep.subr.mxu0 0.0
    %1369 = vmatpush2.msra.mxu0 0.0
    %1370 = vmatprep.subr.mxu0 0.0
    %1371 = vmatpush2.msra.mxu0 0.0
    %1372 = vmatprep.subr.mxu0 0.0
    %1373 = vmatpush2.msra.mxu0 0.0
    %1374 = vmatprep.subr.mxu0 0.0
    %1375 = vmatpush2.msra.mxu0 0.0
    %1376 = vmatprep.subr.mxu0 0.0
    %1377 = vmatpush2.msra.mxu0 0.0
    %1378 = vmatprep.subr.mxu0 0.0
    %1379 = vmatpush2.msra.mxu0 0.0
    %1380 = vmatprep.subr.mxu0 0.0
    %1381 = vmatpush2.msra.mxu0 0.0
    %1382 = vmatprep.subr.mxu0 0.0
    %1383 = vmatpush2.msra.mxu0 0.0
    %1384 = vmatprep.subr.mxu0 0.0
    %1385 = vmatpush2.msra.mxu0 0.0
    %1386 = vmatprep.subr.mxu0 0.0
    %1387 = vmatpush2.msra.mxu0 0.0
    %1388 = vmatprep.subr.mxu0 0.0
    %1389 = vmatpush2.msra.mxu0 0.0
    %1390 = vmatprep.subr.mxu0 0.0
    %1391 = vmatpush2.msra.mxu0 0.0
    %1392 = vmatprep.mubr.f32.mxu0 0.0
    %1393 = vmatmul.mubr.f32.gmra.mxu0 %v1312
    %v1394 = vpop.f32.mrf.mxu0
    %v1395 = vadd.f32 %v682, %v1394
    %v1396 = vpop.f32.mrf.mxu0
    %1397 = vmatprep.mubr.f32.mxu0 0.0
    %1398 = vmatmul.mubr.f32.gmra.mxu0 %v1313
    %v1399 = vpop.f32.mrf.mxu0
    %v1400 = vadd.f32 %v682, %v1399
    %v1401 = vpop.f32.mrf.mxu0
    %1402 = vmatprep.mubr.f32.mxu0 0.0
    %1403 = vmatmul.mubr.f32.gmra.mxu0 %v1314
    %v1404 = vpop.f32.mrf.mxu0
    %v1405 = vadd.f32 %v682, %v1404
    %v1406 = vpop.f32.mrf.mxu0
    %1407 = vmatprep.mubr.f32.mxu0 0.0
    %1408 = vmatmul.mubr.f32.gmra.mxu0 %v1315
    %v1409 = vpop.f32.mrf.mxu0
    %v1410 = vadd.f32 %v682, %v1409
    %v1411 = vpop.f32.mrf.mxu0
    %1412 = vmatprep.mubr.f32.mxu0 0.0
    %1413 = vmatmul.mubr.f32.gmra.mxu0 %v1316
    %v1414 = vpop.f32.mrf.mxu0
    %v1415 = vadd.f32 %v682, %v1414
    %v1416 = vpop.f32.mrf.mxu0
    %1417 = vmatprep.mubr.f32.mxu0 0.0
    %1418 = vmatmul.mubr.f32.gmra.mxu0 %v1317
    %v1419 = vpop.f32.mrf.mxu0
    %v1420 = vadd.f32 %v682, %v1419
    %v1421 = vpop.f32.mrf.mxu0
    %1422 = vmatprep.mubr.f32.mxu0 0.0
    %1423 = vmatmul.mubr.f32.gmra.mxu0 %v1318
    %v1424 = vpop.f32.mrf.mxu0
    %v1425 = vadd.f32 %v682, %v1424
    %v1426 = vpop.f32.mrf.mxu0
    %1427 = vmatprep.mubr.f32.mxu0 0.0
    %1428 = vmatmul.mubr.f32.gmra.mxu0 %v1319
    %v1429 = vpop.f32.mrf.mxu0
    %v1430 = vadd.f32 %v682, %v1429
    %v1431 = vpop.f32.mrf.mxu0
    %1432 = vmatprep.mubr.f32.mxu0 0.0
    %1433 = vmatmul.mubr.f32.gmra.mxu0 %v1320
    %v1434 = vpop.f32.mrf.mxu0
    %v1435 = vadd.f32 %v682, %v1434
    %v1436 = vpop.f32.mrf.mxu0
    %1437 = vmatprep.mubr.f32.mxu0 0.0
    %1438 = vmatmul.mubr.f32.gmra.mxu0 %v1321
    %v1439 = vpop.f32.mrf.mxu0
    %v1440 = vadd.f32 %v682, %v1439
    %v1441 = vpop.f32.mrf.mxu0
    %1442 = vmatprep.mubr.f32.mxu0 0.0
    %1443 = vmatmul.mubr.f32.gmra.mxu0 %v1322
    %v1444 = vpop.f32.mrf.mxu0
    %v1445 = vadd.f32 %v682, %v1444
    %v1446 = vpop.f32.mrf.mxu0
    %1447 = vmatprep.mubr.f32.mxu0 0.0
    %1448 = vmatmul.mubr.f32.gmra.mxu0 %v1323
    %v1449 = vpop.f32.mrf.mxu0
    %v1450 = vadd.f32 %v682, %v1449
    %v1451 = vpop.f32.mrf.mxu0
    %1452 = vmatprep.mubr.f32.mxu0 0.0
    %1453 = vmatmul.mubr.f32.gmra.mxu0 %v1324
    %v1454 = vpop.f32.mrf.mxu0
    %v1455 = vadd.f32 %v682, %v1454
    %v1456 = vpop.f32.mrf.mxu0
    %1457 = vmatprep.mubr.f32.mxu0 0.0
    %1458 = vmatmul.mubr.f32.gmra.mxu0 %v1325
    %v1459 = vpop.f32.mrf.mxu0
    %v1460 = vadd.f32 %v682, %v1459
    %v1461 = vpop.f32.mrf.mxu0
    %1462 = vmatprep.mubr.f32.mxu0 0.0
    %1463 = vmatmul.mubr.f32.gmra.mxu0 %v1326
    %v1464 = vpop.f32.mrf.mxu0
    %v1465 = vadd.f32 %v682, %v1464
    %v1466 = vpop.f32.mrf.mxu0
    %1467 = vmatprep.mubr.f32.mxu0 0.0
    %1468 = vmatmul.mubr.f32.gmra.mxu0 %v1327
    %v1469 = vpop.f32.mrf.mxu0
    %v1470 = vadd.f32 %v682, %v1469
    %v1471 = vpop.f32.mrf.mxu0
    %1472 = vdwg.mxu0
    %v1473 = vadd.f32 %v1151, %v1395
    %v1474 = vadd.f32 %v1152, %v1400
    %v1475 = vadd.f32 %v1153, %v1405
    %v1476 = vadd.f32 %v1154, %v1410
    %v1477 = vadd.f32 %v1155, %v1415
    %v1478 = vadd.f32 %v1156, %v1420
    %v1479 = vadd.f32 %v1157, %v1425
    %v1480 = vadd.f32 %v1158, %v1430
    %v1481 = vadd.f32 %v1159, %v1435
    %v1482 = vadd.f32 %v1160, %v1440
    %v1483 = vadd.f32 %v1161, %v1445
    %v1484 = vadd.f32 %v1162, %v1450
    %v1485 = vadd.f32 %v1163, %v1455
    %v1486 = vadd.f32 %v1164, %v1460
    %v1487 = vadd.f32 %v1165, %v1465
    %v1488 = vadd.f32 %v1166, %v1470
    %1489 = vmatprep.subr.mxu0 0.0
    %1490 = vmatpush1.msra.mxu0 %v492
    %1491 = vmatprep.subr.mxu0 0.0
    %1492 = vmatpush1.msra.mxu0 %v491
    %1493 = vmatprep.subr.mxu0 0.0
    %1494 = vmatpush1.msra.mxu0 %v490
    %1495 = vmatprep.subr.mxu0 0.0
    %1496 = vmatpush1.msra.mxu0 %v489
    %1497 = vmatprep.subr.mxu0 0.0
    %1498 = vmatpush1.msra.mxu0 %v488
    %1499 = vmatprep.subr.mxu0 0.0
    %1500 = vmatpush1.msra.mxu0 %v487
    %1501 = vmatprep.subr.mxu0 0.0
    %1502 = vmatpush1.msra.mxu0 %v486
    %1503 = vmatprep.subr.mxu0 0.0
    %1504 = vmatpush1.msra.mxu0 %v485
    %1505 = vmatprep.subr.mxu0 0.0
    %1506 = vmatpush1.msra.mxu0 %v484
    %1507 = vmatprep.subr.mxu0 0.0
    %1508 = vmatpush1.msra.mxu0 %v483
    %1509 = vmatprep.subr.mxu0 0.0
    %1510 = vmatpush1.msra.mxu0 %v482
    %1511 = vmatprep.subr.mxu0 0.0
    %1512 = vmatpush1.msra.mxu0 %v481
    %1513 = vmatprep.subr.mxu0 0.0
    %1514 = vmatpush1.msra.mxu0 %v480
    %1515 = vmatprep.subr.mxu0 0.0
    %1516 = vmatpush1.msra.mxu0 %v479
    %1517 = vmatprep.subr.mxu0 0.0
    %1518 = vmatpush1.msra.mxu0 %v478
    %1519 = vmatprep.subr.mxu0 0.0
    %1520 = vmatpush1.msra.mxu0 %v477
    %1521 = vmatprep.subr.mxu0 0.0
    %1522 = vmatpush2.msra.mxu0 0.0
    %1523 = vmatprep.subr.mxu0 0.0
    %1524 = vmatpush2.msra.mxu0 0.0
    %1525 = vmatprep.subr.mxu0 0.0
    %1526 = vmatpush2.msra.mxu0 0.0
    %1527 = vmatprep.subr.mxu0 0.0
    %1528 = vmatpush2.msra.mxu0 0.0
    %1529 = vmatprep.subr.mxu0 0.0
    %1530 = vmatpush2.msra.mxu0 0.0
    %1531 = vmatprep.subr.mxu0 0.0
    %1532 = vmatpush2.msra.mxu0 0.0
    %1533 = vmatprep.subr.mxu0 0.0
    %1534 = vmatpush2.msra.mxu0 0.0
    %1535 = vmatprep.subr.mxu0 0.0
    %1536 = vmatpush2.msra.mxu0 0.0
    %1537 = vmatprep.subr.mxu0 0.0
    %1538 = vmatpush2.msra.mxu0 0.0
    %1539 = vmatprep.subr.mxu0 0.0
    %1540 = vmatpush2.msra.mxu0 0.0
    %1541 = vmatprep.subr.mxu0 0.0
    %1542 = vmatpush2.msra.mxu0 0.0
    %1543 = vmatprep.subr.mxu0 0.0
    %1544 = vmatpush2.msra.mxu0 0.0
    %1545 = vmatprep.subr.mxu0 0.0
    %1546 = vmatpush2.msra.mxu0 0.0
    %1547 = vmatprep.subr.mxu0 0.0
    %1548 = vmatpush2.msra.mxu0 0.0
    %1549 = vmatprep.subr.mxu0 0.0
    %1550 = vmatpush2.msra.mxu0 0.0
    %1551 = vmatprep.subr.mxu0 0.0
    %1552 = vmatpush2.msra.mxu0 0.0
    %1553 = vmatprep.mubr.f32.mxu0 0.0
    %1554 = vmatmul.mubr.f32.gmra.mxu0 %v1473
    %v1555 = vpop.f32.mrf.mxu0
    %v1556 = vadd.f32 %v515, %v1555
    %v1557 = vpop.f32.mrf.mxu0
    %1558 = vmatprep.mubr.f32.mxu0 0.0
    %1559 = vmatmul.mubr.f32.gmra.mxu0 %v1474
    %v1560 = vpop.f32.mrf.mxu0
    %v1561 = vadd.f32 %v515, %v1560
    %v1562 = vpop.f32.mrf.mxu0
    %1563 = vmatprep.mubr.f32.mxu0 0.0
    %1564 = vmatmul.mubr.f32.gmra.mxu0 %v1475
    %v1565 = vpop.f32.mrf.mxu0
    %v1566 = vadd.f32 %v515, %v1565
    %v1567 = vpop.f32.mrf.mxu0
    %1568 = vmatprep.mubr.f32.mxu0 0.0
    %1569 = vmatmul.mubr.f32.gmra.mxu0 %v1476
    %v1570 = vpop.f32.mrf.mxu0
    %v1571 = vadd.f32 %v515, %v1570
    %v1572 = vpop.f32.mrf.mxu0
    %1573 = vmatprep.mubr.f32.mxu0 0.0
    %1574 = vmatmul.mubr.f32.gmra.mxu0 %v1477
    %v1575 = vpop.f32.mrf.mxu0
    %v1576 = vadd.f32 %v515, %v1575
    %v1577 = vpop.f32.mrf.mxu0
    %1578 = vmatprep.mubr.f32.mxu0 0.0
    %1579 = vmatmul.mubr.f32.gmra.mxu0 %v1478
    %v1580 = vpop.f32.mrf.mxu0
    %v1581 = vadd.f32 %v515, %v1580
    %v1582 = vpop.f32.mrf.mxu0
    %1583 = vmatprep.mubr.f32.mxu0 0.0
    %1584 = vmatmul.mubr.f32.gmra.mxu0 %v1479
    %v1585 = vpop.f32.mrf.mxu0
    %v1586 = vadd.f32 %v515, %v1585
    %v1587 = vpop.f32.mrf.mxu0
    %1588 = vmatprep.mubr.f32.mxu0 0.0
    %1589 = vmatmul.mubr.f32.gmra.mxu0 %v1480
    %v1590 = vpop.f32.mrf.mxu0
    %v1591 = vadd.f32 %v515, %v1590
    %v1592 = vpop.f32.mrf.mxu0
    %1593 = vmatprep.mubr.f32.mxu0 0.0
    %1594 = vmatmul.mubr.f32.gmra.mxu0 %v1481
    %v1595 = vpop.f32.mrf.mxu0
    %v1596 = vadd.f32 %v515, %v1595
    %v1597 = vpop.f32.mrf.mxu0
    %1598 = vmatprep.mubr.f32.mxu0 0.0
    %1599 = vmatmul.mubr.f32.gmra.mxu0 %v1482
    %v1600 = vpop.f32.mrf.mxu0
    %v1601 = vadd.f32 %v515, %v1600
    %v1602 = vpop.f32.mrf.mxu0
    %1603 = vmatprep.mubr.f32.mxu0 0.0
    %1604 = vmatmul.mubr.f32.gmra.mxu0 %v1483
    %v1605 = vpop.f32.mrf.mxu0
    %v1606 = vadd.f32 %v515, %v1605
    %v1607 = vpop.f32.mrf.mxu0
    %1608 = vmatprep.mubr.f32.mxu0 0.0
    %1609 = vmatmul.mubr.f32.gmra.mxu0 %v1484
    %v1610 = vpop.f32.mrf.mxu0
    %v1611 = vadd.f32 %v515, %v1610
    %v1612 = vpop.f32.mrf.mxu0
    %1613 = vmatprep.mubr.f32.mxu0 0.0
    %1614 = vmatmul.mubr.f32.gmra.mxu0 %v1485
    %v1615 = vpop.f32.mrf.mxu0
    %v1616 = vadd.f32 %v515, %v1615
    %v1617 = vpop.f32.mrf.mxu0
    %1618 = vmatprep.mubr.f32.mxu0 0.0
    %1619 = vmatmul.mubr.f32.gmra.mxu0 %v1486
    %v1620 = vpop.f32.mrf.mxu0
    %v1621 = vadd.f32 %v515, %v1620
    %v1622 = vpop.f32.mrf.mxu0
    %1623 = vmatprep.mubr.f32.mxu0 0.0
    %1624 = vmatmul.mubr.f32.gmra.mxu0 %v1487
    %v1625 = vpop.f32.mrf.mxu0
    %v1626 = vadd.f32 %v515, %v1625
    %v1627 = vpop.f32.mrf.mxu0
    %1628 = vmatprep.mubr.f32.mxu0 0.0
    %1629 = vmatmul.mubr.f32.gmra.mxu0 %v1488
    %v1630 = vpop.f32.mrf.mxu0
    %v1631 = vadd.f32 %v515, %v1630
    %v1632 = vpop.f32.mrf.mxu0
    %1633 = vdwg.mxu0
    %v1634 = vtanh.pop %v1556
    %v1635 = vtanh.pop %v1561
    %v1636 = vtanh.pop %v1566
    %v1637 = vtanh.pop %v1571
    %v1638 = vtanh.pop %v1576
    %v1639 = vtanh.pop %v1581
    %v1640 = vtanh.pop %v1586
    %v1641 = vtanh.pop %v1591
    %v1642 = vtanh.pop %v1596
    %v1643 = vtanh.pop %v1601
    %v1644 = vtanh.pop %v1606
    %v1645 = vtanh.pop %v1611
    %v1646 = vtanh.pop %v1616
    %v1647 = vtanh.pop %v1621
    %v1648 = vtanh.pop %v1626
    %v1649 = vtanh.pop %v1631
    %1650 = vmatprep.subr.mxu0 0.0
    %1651 = vmatpush1.msra.mxu0 %v508
    %1652 = vmatprep.subr.mxu0 0.0
    %1653 = vmatpush1.msra.mxu0 %v507
    %1654 = vmatprep.subr.mxu0 0.0
    %1655 = vmatpush1.msra.mxu0 %v506
    %1656 = vmatprep.subr.mxu0 0.0
    %1657 = vmatpush1.msra.mxu0 %v505
    %1658 = vmatprep.subr.mxu0 0.0
    %1659 = vmatpush1.msra.mxu0 %v504
    %1660 = vmatprep.subr.mxu0 0.0
    %1661 = vmatpush1.msra.mxu0 %v503
    %1662 = vmatprep.subr.mxu0 0.0
    %1663 = vmatpush1.msra.mxu0 %v502
    %1664 = vmatprep.subr.mxu0 0.0
    %1665 = vmatpush1.msra.mxu0 %v501
    %1666 = vmatprep.subr.mxu0 0.0
    %1667 = vmatpush1.msra.mxu0 %v500
    %1668 = vmatprep.subr.mxu0 0.0
    %1669 = vmatpush1.msra.mxu0 %v499
    %1670 = vmatprep.subr.mxu0 0.0
    %1671 = vmatpush1.msra.mxu0 %v498
    %1672 = vmatprep.subr.mxu0 0.0
    %1673 = vmatpush1.msra.mxu0 %v497
    %1674 = vmatprep.subr.mxu0 0.0
    %1675 = vmatpush1.msra.mxu0 %v496
    %1676 = vmatprep.subr.mxu0 0.0
    %1677 = vmatpush1.msra.mxu0 %v495
    %1678 = vmatprep.subr.mxu0 0.0
    %1679 = vmatpush1.msra.mxu0 %v494
    %1680 = vmatprep.subr.mxu0 0.0
    %1681 = vmatpush1.msra.mxu0 %v493
    %1682 = vmatprep.subr.mxu0 0.0
    %1683 = vmatpush2.msra.mxu0 0.0
    %1684 = vmatprep.subr.mxu0 0.0
    %1685 = vmatpush2.msra.mxu0 0.0
    %1686 = vmatprep.subr.mxu0 0.0
    %1687 = vmatpush2.msra.mxu0 0.0
    %1688 = vmatprep.subr.mxu0 0.0
    %1689 = vmatpush2.msra.mxu0 0.0
    %1690 = vmatprep.subr.mxu0 0.0
    %1691 = vmatpush2.msra.mxu0 0.0
    %1692 = vmatprep.subr.mxu0 0.0
    %1693 = vmatpush2.msra.mxu0 0.0
    %1694 = vmatprep.subr.mxu0 0.0
    %1695 = vmatpush2.msra.mxu0 0.0
    %1696 = vmatprep.subr.mxu0 0.0
    %1697 = vmatpush2.msra.mxu0 0.0
    %1698 = vmatprep.subr.mxu0 0.0
    %1699 = vmatpush2.msra.mxu0 0.0
    %1700 = vmatprep.subr.mxu0 0.0
    %1701 = vmatpush2.msra.mxu0 0.0
    %1702 = vmatprep.subr.mxu0 0.0
    %1703 = vmatpush2.msra.mxu0 0.0
    %1704 = vmatprep.subr.mxu0 0.0
    %1705 = vmatpush2.msra.mxu0 0.0
    %1706 = vmatprep.subr.mxu0 0.0
    %1707 = vmatpush2.msra.mxu0 0.0
    %1708 = vmatprep.subr.mxu0 0.0
    %1709 = vmatpush2.msra.mxu0 0.0
    %1710 = vmatprep.subr.mxu0 0.0
    %1711 = vmatpush2.msra.mxu0 0.0
    %1712 = vmatprep.subr.mxu0 0.0
    %1713 = vmatpush2.msra.mxu0 0.0
    %1714 = vmatprep.mubr.f32.mxu0 0.0
    %1715 = vmatmul.mubr.f32.gmra.mxu0 %v1634
    %v1716 = vpop.f32.mrf.mxu0
    %v1717 = vadd.f32 %v682, %v1716
    %v1718 = vpop.f32.mrf.mxu0
    %1719 = vmatprep.mubr.f32.mxu0 0.0
    %1720 = vmatmul.mubr.f32.gmra.mxu0 %v1635
    %v1721 = vpop.f32.mrf.mxu0
    %v1722 = vadd.f32 %v682, %v1721
    %v1723 = vpop.f32.mrf.mxu0
    %1724 = vmatprep.mubr.f32.mxu0 0.0
    %1725 = vmatmul.mubr.f32.gmra.mxu0 %v1636
    %v1726 = vpop.f32.mrf.mxu0
    %v1727 = vadd.f32 %v682, %v1726
    %v1728 = vpop.f32.mrf.mxu0
    %1729 = vmatprep.mubr.f32.mxu0 0.0
    %1730 = vmatmul.mubr.f32.gmra.mxu0 %v1637
    %v1731 = vpop.f32.mrf.mxu0
    %v1732 = vadd.f32 %v682, %v1731
    %v1733 = vpop.f32.mrf.mxu0
    %1734 = vmatprep.mubr.f32.mxu0 0.0
    %1735 = vmatmul.mubr.f32.gmra.mxu0 %v1638
    %v1736 = vpop.f32.mrf.mxu0
    %v1737 = vadd.f32 %v682, %v1736
    %v1738 = vpop.f32.mrf.mxu0
    %1739 = vmatprep.mubr.f32.mxu0 0.0
    %1740 = vmatmul.mubr.f32.gmra.mxu0 %v1639
    %v1741 = vpop.f32.mrf.mxu0
    %v1742 = vadd.f32 %v682, %v1741
    %v1743 = vpop.f32.mrf.mxu0
    %1744 = vmatprep.mubr.f32.mxu0 0.0
    %1745 = vmatmul.mubr.f32.gmra.mxu0 %v1640
    %v1746 = vpop.f32.mrf.mxu0
    %v1747 = vadd.f32 %v682, %v1746
    %v1748 = vpop.f32.mrf.mxu0
    %1749 = vmatprep.mubr.f32.mxu0 0.0
    %1750 = vmatmul.mubr.f32.gmra.mxu0 %v1641
    %v1751 = vpop.f32.mrf.mxu0
    %v1752 = vadd.f32 %v682, %v1751
    %v1753 = vpop.f32.mrf.mxu0
    %1754 = vmatprep.mubr.f32.mxu0 0.0
    %1755 = vmatmul.mubr.f32.gmra.mxu0 %v1642
    %v1756 = vpop.f32.mrf.mxu0
    %v1757 = vadd.f32 %v682, %v1756
    %v1758 = vpop.f32.mrf.mxu0
    %1759 = vmatprep.mubr.f32.mxu0 0.0
    %1760 = vmatmul.mubr.f32.gmra.mxu0 %v1643
    %v1761 = vpop.f32.mrf.mxu0
    %v1762 = vadd.f32 %v682, %v1761
    %v1763 = vpop.f32.mrf.mxu0
    %1764 = vmatprep.mubr.f32.mxu0 0.0
    %1765 = vmatmul.mubr.f32.gmra.mxu0 %v1644
    %v1766 = vpop.f32.mrf.mxu0
    %v1767 = vadd.f32 %v682, %v1766
    %v1768 = vpop.f32.mrf.mxu0
    %1769 = vmatprep.mubr.f32.mxu0 0.0
    %1770 = vmatmul.mubr.f32.gmra.mxu0 %v1645
    %v1771 = vpop.f32.mrf.mxu0
    %v1772 = vadd.f32 %v682, %v1771
    %v1773 = vpop.f32.mrf.mxu0
    %1774 = vmatprep.mubr.f32.mxu0 0.0
    %1775 = vmatmul.mubr.f32.gmra.mxu0 %v1646
    %v1776 = vpop.f32.mrf.mxu0
    %v1777 = vadd.f32 %v682, %v1776
    %v1778 = vpop.f32.mrf.mxu0
    %1779 = vmatprep.mubr.f32.mxu0 0.0
    %1780 = vmatmul.mubr.f32.gmra.mxu0 %v1647
    %v1781 = vpop.f32.mrf.mxu0
    %v1782 = vadd.f32 %v682, %v1781
    %v1783 = vpop.f32.mrf.mxu0
    %1784 = vmatprep.mubr.f32.mxu0 0.0
    %1785 = vmatmul.mubr.f32.gmra.mxu0 %v1648
    %v1786 = vpop.f32.mrf.mxu0
    %v1787 = vadd.f32 %v682, %v1786
    %v1788 = vpop.f32.mrf.mxu0
    %1789 = vmatprep.mubr.f32.mxu0 0.0
    %1790 = vmatmul.mubr.f32.gmra.mxu0 %v1649
    %v1791 = vpop.f32.mrf.mxu0
    %v1792 = vadd.f32 %v682, %v1791
    %v1793 = vpop.f32.mrf.mxu0
    %1794 = vdwg.mxu0
    %v1795 = vadd.f32 %v1473, %v1717
    %v1796 = vadd.f32 %v1474, %v1722
    %v1797 = vadd.f32 %v1475, %v1727
    %v1798 = vadd.f32 %v1476, %v1732
    %v1799 = vadd.f32 %v1477, %v1737
    %v1800 = vadd.f32 %v1478, %v1742
    %v1801 = vadd.f32 %v1479, %v1747
    %v1802 = vadd.f32 %v1480, %v1752
    %v1803 = vadd.f32 %v1481, %v1757
    %v1804 = vadd.f32 %v1482, %v1762
    %v1805 = vadd.f32 %v1483, %v1767
    %v1806 = vadd.f32 %v1484, %v1772
    %v1807 = vadd.f32 %v1485, %v1777
    %v1808 = vadd.f32 %v1486, %v1782
    %v1809 = vadd.f32 %v1487, %v1787
    %v1810 = vadd.f32 %v1488, %v1792
    %v1811 = vld [vmem:[#allocation7] sm:$0xff]
    %v1812 = vld [vmem:[#allocation7 + $0x8] sm:$0xff]
    %v1813 = vld [vmem:[#allocation7 + $0x10] sm:$0xff]
    %v1814 = vld [vmem:[#allocation7 + $0x18] sm:$0xff]
    %v1815 = vld [vmem:[#allocation7 + $0x20] sm:$0xff]
    %v1816 = vld [vmem:[#allocation7 + $0x28] sm:$0xff]
    %v1817 = vld [vmem:[#allocation7 + $0x30] sm:$0xff]
    %v1818 = vld [vmem:[#allocation7 + $0x38] sm:$0xff]
    %v1819 = vld [vmem:[#allocation7 + $0x40] sm:$0xff]
    %v1820 = vld [vmem:[#allocation7 + $0x48] sm:$0xff]
    %v1821 = vld [vmem:[#allocation7 + $0x50] sm:$0xff]
    %v1822 = vld [vmem:[#allocation7 + $0x58] sm:$0xff]
    %v1823 = vld [vmem:[#allocation7 + $0x60] sm:$0xff]
    %v1824 = vld [vmem:[#allocation7 + $0x68] sm:$0xff]
    %v1825 = vld [vmem:[#allocation7 + $0x70] sm:$0xff]
    %v1826 = vld [vmem:[#allocation7 + $0x78] sm:$0xff]
    %v1827 = vld [vmem:[%s9] sm:$0x1]
    %v1829 = vlaneseq
    %v1830 = vshrl.u32 %v1829, 7
    %v1831 = vsub.s32 0, %v1830
    %v1832 = vrot.slane %v1827, %v1831
    %1834 = vmatprep.subr.mxu0 0.0
    %1835 = vmatpush1.msra.mxu0 %v1826
    %1836 = vmatprep.subr.mxu0 0.0
    %1837 = vmatpush1.msra.mxu0 %v1825
    %1838 = vmatprep.subr.mxu0 0.0
    %1839 = vmatpush1.msra.mxu0 %v1824
    %1840 = vmatprep.subr.mxu0 0.0
    %1841 = vmatpush1.msra.mxu0 %v1823
    %1842 = vmatprep.subr.mxu0 0.0
    %1843 = vmatpush1.msra.mxu0 %v1822
    %1844 = vmatprep.subr.mxu0 0.0
    %1845 = vmatpush1.msra.mxu0 %v1821
    %1846 = vmatprep.subr.mxu0 0.0
    %1847 = vmatpush1.msra.mxu0 %v1820
    %1848 = vmatprep.subr.mxu0 0.0
    %1849 = vmatpush1.msra.mxu0 %v1819
    %1850 = vmatprep.subr.mxu0 0.0
    %1851 = vmatpush1.msra.mxu0 %v1818
    %1852 = vmatprep.subr.mxu0 0.0
    %1853 = vmatpush1.msra.mxu0 %v1817
    %1854 = vmatprep.subr.mxu0 0.0
    %1855 = vmatpush1.msra.mxu0 %v1816
    %1856 = vmatprep.subr.mxu0 0.0
    %1857 = vmatpush1.msra.mxu0 %v1815
    %1858 = vmatprep.subr.mxu0 0.0
    %1859 = vmatpush1.msra.mxu0 %v1814
    %1860 = vmatprep.subr.mxu0 0.0
    %1861 = vmatpush1.msra.mxu0 %v1813
    %1862 = vmatprep.subr.mxu0 0.0
    %1863 = vmatpush1.msra.mxu0 %v1812
    %1864 = vmatprep.subr.mxu0 0.0
    %1865 = vmatpush1.msra.mxu0 %v1811
    %1866 = vmatprep.subr.mxu0 0.0
    %1867 = vmatpush2.msra.mxu0 0.0
    %1868 = vmatprep.subr.mxu0 0.0
    %1869 = vmatpush2.msra.mxu0 0.0
    %1870 = vmatprep.subr.mxu0 0.0
    %1871 = vmatpush2.msra.mxu0 0.0
    %1872 = vmatprep.subr.mxu0 0.0
    %1873 = vmatpush2.msra.mxu0 0.0
    %1874 = vmatprep.subr.mxu0 0.0
    %1875 = vmatpush2.msra.mxu0 0.0
    %1876 = vmatprep.subr.mxu0 0.0
    %1877 = vmatpush2.msra.mxu0 0.0
    %1878 = vmatprep.subr.mxu0 0.0
    %1879 = vmatpush2.msra.mxu0 0.0
    %1880 = vmatprep.subr.mxu0 0.0
    %1881 = vmatpush2.msra.mxu0 0.0
    %1882 = vmatprep.subr.mxu0 0.0
    %1883 = vmatpush2.msra.mxu0 0.0
    %1884 = vmatprep.subr.mxu0 0.0
    %1885 = vmatpush2.msra.mxu0 0.0
    %1886 = vmatprep.subr.mxu0 0.0
    %1887 = vmatpush2.msra.mxu0 0.0
    %1888 = vmatprep.subr.mxu0 0.0
    %1889 = vmatpush2.msra.mxu0 0.0
    %1890 = vmatprep.subr.mxu0 0.0
    %1891 = vmatpush2.msra.mxu0 0.0
    %1892 = vmatprep.subr.mxu0 0.0
    %1893 = vmatpush2.msra.mxu0 0.0
    %1894 = vmatprep.subr.mxu0 0.0
    %1895 = vmatpush2.msra.mxu0 0.0
    %1896 = vmatprep.subr.mxu0 0.0
    %1897 = vmatpush2.msra.mxu0 0.0
    %1898 = vmatprep.mubr.f32.mxu0 0.0
    %1899 = vmatmul.mubr.f32.gmra.mxu0 %v1795
    %v1900 = vpop.f32.mrf.mxu0
    %v1901 = vadd.f32 %v1832, %v1900
    %v1902 = vpop.f32.mrf.mxu0
    %1903 = vmatprep.mubr.f32.mxu0 0.0
    %1904 = vmatmul.mubr.f32.gmra.mxu0 %v1796
    %v1905 = vpop.f32.mrf.mxu0
    %v1906 = vadd.f32 %v1832, %v1905
    %v1907 = vpop.f32.mrf.mxu0
    %1908 = vmatprep.mubr.f32.mxu0 0.0
    %1909 = vmatmul.mubr.f32.gmra.mxu0 %v1797
    %v1910 = vpop.f32.mrf.mxu0
    %v1911 = vadd.f32 %v1832, %v1910
    %v1912 = vpop.f32.mrf.mxu0
    %1913 = vmatprep.mubr.f32.mxu0 0.0
    %1914 = vmatmul.mubr.f32.gmra.mxu0 %v1798
    %v1915 = vpop.f32.mrf.mxu0
    %v1916 = vadd.f32 %v1832, %v1915
    %v1917 = vpop.f32.mrf.mxu0
    %1918 = vmatprep.mubr.f32.mxu0 0.0
    %1919 = vmatmul.mubr.f32.gmra.mxu0 %v1799
    %v1920 = vpop.f32.mrf.mxu0
    %v1921 = vadd.f32 %v1832, %v1920
    %v1922 = vpop.f32.mrf.mxu0
    %1923 = vmatprep.mubr.f32.mxu0 0.0
    %1924 = vmatmul.mubr.f32.gmra.mxu0 %v1800
    %v1925 = vpop.f32.mrf.mxu0
    %v1926 = vadd.f32 %v1832, %v1925
    %v1927 = vpop.f32.mrf.mxu0
    %1928 = vmatprep.mubr.f32.mxu0 0.0
    %1929 = vmatmul.mubr.f32.gmra.mxu0 %v1801
    %v1930 = vpop.f32.mrf.mxu0
    %v1931 = vadd.f32 %v1832, %v1930
    %v1932 = vpop.f32.mrf.mxu0
    %1933 = vmatprep.mubr.f32.mxu0 0.0
    %1934 = vmatmul.mubr.f32.gmra.mxu0 %v1802
    %v1935 = vpop.f32.mrf.mxu0
    %v1936 = vadd.f32 %v1832, %v1935
    %v1937 = vpop.f32.mrf.mxu0
    %1938 = vmatprep.mubr.f32.mxu0 0.0
    %1939 = vmatmul.mubr.f32.gmra.mxu0 %v1803
    %v1940 = vpop.f32.mrf.mxu0
    %v1941 = vadd.f32 %v1832, %v1940
    %v1942 = vpop.f32.mrf.mxu0
    %1943 = vmatprep.mubr.f32.mxu0 0.0
    %1944 = vmatmul.mubr.f32.gmra.mxu0 %v1804
    %v1945 = vpop.f32.mrf.mxu0
    %v1946 = vadd.f32 %v1832, %v1945
    %v1947 = vpop.f32.mrf.mxu0
    %1948 = vmatprep.mubr.f32.mxu0 0.0
    %1949 = vmatmul.mubr.f32.gmra.mxu0 %v1805
    %v1950 = vpop.f32.mrf.mxu0
    %v1951 = vadd.f32 %v1832, %v1950
    %v1952 = vpop.f32.mrf.mxu0
    %1953 = vmatprep.mubr.f32.mxu0 0.0
    %1954 = vmatmul.mubr.f32.gmra.mxu0 %v1806
    %v1955 = vpop.f32.mrf.mxu0
    %v1956 = vadd.f32 %v1832, %v1955
    %v1957 = vpop.f32.mrf.mxu0
    %1958 = vmatprep.mubr.f32.mxu0 0.0
    %1959 = vmatmul.mubr.f32.gmra.mxu0 %v1807
    %v1960 = vpop.f32.mrf.mxu0
    %v1961 = vadd.f32 %v1832, %v1960
    %v1962 = vpop.f32.mrf.mxu0
    %1963 = vmatprep.mubr.f32.mxu0 0.0
    %1964 = vmatmul.mubr.f32.gmra.mxu0 %v1808
    %v1965 = vpop.f32.mrf.mxu0
    %v1966 = vadd.f32 %v1832, %v1965
    %v1967 = vpop.f32.mrf.mxu0
    %1968 = vmatprep.mubr.f32.mxu0 0.0
    %1969 = vmatmul.mubr.f32.gmra.mxu0 %v1809
    %v1970 = vpop.f32.mrf.mxu0
    %v1971 = vadd.f32 %v1832, %v1970
    %v1972 = vpop.f32.mrf.mxu0
    %1973 = vmatprep.mubr.f32.mxu0 0.0
    %1974 = vmatmul.mubr.f32.gmra.mxu0 %v1810
    %v1975 = vpop.f32.mrf.mxu0
    %v1976 = vadd.f32 %v1832, %v1975
    %v1977 = vpop.f32.mrf.mxu0
    %1978 = vdwg.mxu0
    %v1979 = vxor.u32 %v1901, 2147483648
    %v1980 = vxor.u32 %v1906, 2147483648
    %v1981 = vxor.u32 %v1911, 2147483648
    %v1982 = vxor.u32 %v1916, 2147483648
    %v1983 = vxor.u32 %v1921, 2147483648
    %v1984 = vxor.u32 %v1926, 2147483648
    %v1985 = vxor.u32 %v1931, 2147483648
    %v1986 = vxor.u32 %v1936, 2147483648
    %v1987 = vxor.u32 %v1941, 2147483648
    %v1988 = vxor.u32 %v1946, 2147483648
    %v1989 = vxor.u32 %v1951, 2147483648
    %v1990 = vxor.u32 %v1956, 2147483648
    %v1991 = vxor.u32 %v1961, 2147483648
    %v1992 = vxor.u32 %v1966, 2147483648
    %v1993 = vxor.u32 %v1971, 2147483648
    %v1994 = vxor.u32 %v1976, 2147483648
    %v1995 = vmul.f32 %v1979, 1.442695
    %v1996 = vpow.pop %v1995
    %v1997 = vmul.f32 %v1980, 1.442695
    %v1998 = vpow.pop %v1997
    %v1999 = vmul.f32 %v1981, 1.442695
    %v2000 = vpow.pop %v1999
    %v2001 = vmul.f32 %v1982, 1.442695
    %v2002 = vpow.pop %v2001
    %v2003 = vmul.f32 %v1983, 1.442695
    %v2004 = vpow.pop %v2003
    %v2005 = vmul.f32 %v1984, 1.442695
    %v2006 = vpow.pop %v2005
    %v2007 = vmul.f32 %v1985, 1.442695
    %v2008 = vpow.pop %v2007
    %v2009 = vmul.f32 %v1986, 1.442695
    %v2010 = vpow.pop %v2009
    %v2011 = vmul.f32 %v1987, 1.442695
    %v2012 = vpow.pop %v2011
    %v2013 = vmul.f32 %v1988, 1.442695
    %v2014 = vpow.pop %v2013
    %v2015 = vmul.f32 %v1989, 1.442695
    %v2016 = vpow.pop %v2015
    %v2017 = vmul.f32 %v1990, 1.442695
    %v2018 = vpow.pop %v2017
    %v2019 = vmul.f32 %v1991, 1.442695
    %v2020 = vpow.pop %v2019
    %v2021 = vmul.f32 %v1992, 1.442695
    %v2022 = vpow.pop %v2021
    %v2023 = vmul.f32 %v1993, 1.442695
    %v2024 = vpow.pop %v2023
    %v2025 = vmul.f32 %v1994, 1.442695
    %v2026 = vpow.pop %v2025
    %v2027 = vadd.f32 %v1996, 1.0
    %v2028 = vadd.f32 %v1998, 1.0
    %v2029 = vadd.f32 %v2000, 1.0
    %v2030 = vadd.f32 %v2002, 1.0
    %v2031 = vadd.f32 %v2004, 1.0
    %v2032 = vadd.f32 %v2006, 1.0
    %v2033 = vadd.f32 %v2008, 1.0
    %v2034 = vadd.f32 %v2010, 1.0
    %v2035 = vadd.f32 %v2012, 1.0
    %v2036 = vadd.f32 %v2014, 1.0
    %v2037 = vadd.f32 %v2016, 1.0
    %v2038 = vadd.f32 %v2018, 1.0
    %v2039 = vadd.f32 %v2020, 1.0
    %v2040 = vadd.f32 %v2022, 1.0
    %v2041 = vadd.f32 %v2024, 1.0
    %v2042 = vadd.f32 %v2026, 1.0
    %v2043 = vrcp.pop %v2027
    %v2044 = vmul.f32 1.0, %v2043
    %v2045 = vrcp.pop %v2028
    %v2046 = vmul.f32 1.0, %v2045
    %v2047 = vrcp.pop %v2029
    %v2048 = vmul.f32 1.0, %v2047
    %v2049 = vrcp.pop %v2030
    %v2050 = vmul.f32 1.0, %v2049
    %v2051 = vrcp.pop %v2031
    %v2052 = vmul.f32 1.0, %v2051
    %v2053 = vrcp.pop %v2032
    %v2054 = vmul.f32 1.0, %v2053
    %v2055 = vrcp.pop %v2033
    %v2056 = vmul.f32 1.0, %v2055
    %v2057 = vrcp.pop %v2034
    %v2058 = vmul.f32 1.0, %v2057
    %v2059 = vrcp.pop %v2035
    %v2060 = vmul.f32 1.0, %v2059
    %v2061 = vrcp.pop %v2036
    %v2062 = vmul.f32 1.0, %v2061
    %v2063 = vrcp.pop %v2037
    %v2064 = vmul.f32 1.0, %v2063
    %v2065 = vrcp.pop %v2038
    %v2066 = vmul.f32 1.0, %v2065
    %v2067 = vrcp.pop %v2039
    %v2068 = vmul.f32 1.0, %v2067
    %v2069 = vrcp.pop %v2040
    %v2070 = vmul.f32 1.0, %v2069
    %v2071 = vrcp.pop %v2041
    %v2072 = vmul.f32 1.0, %v2071
    %v2073 = vrcp.pop %v2042
    %v2074 = vmul.f32 1.0, %v2073
    %2075 = vst [vmem:[#allocation8] sm:$0xff] %v2044
    %2076 = vst [vmem:[#allocation8 + $0x8] sm:$0xff] %v2046
    %2077 = vst [vmem:[#allocation8 + $0x10] sm:$0xff] %v2048
    %2078 = vst [vmem:[#allocation8 + $0x18] sm:$0xff] %v2050
    %2079 = vst [vmem:[#allocation8 + $0x20] sm:$0xff] %v2052
    %2080 = vst [vmem:[#allocation8 + $0x28] sm:$0xff] %v2054
    %2081 = vst [vmem:[#allocation8 + $0x30] sm:$0xff] %v2056
    %2082 = vst [vmem:[#allocation8 + $0x38] sm:$0xff] %v2058
    %2083 = vst [vmem:[#allocation8 + $0x40] sm:$0xff] %v2060
    %2084 = vst [vmem:[#allocation8 + $0x48] sm:$0xff] %v2062
    %2085 = vst [vmem:[#allocation8 + $0x50] sm:$0xff] %v2064
    %2086 = vst [vmem:[#allocation8 + $0x58] sm:$0xff] %v2066
    %2087 = vst [vmem:[#allocation8 + $0x60] sm:$0xff] %v2068
    %2088 = vst [vmem:[#allocation8 + $0x68] sm:$0xff] %v2070
    %2089 = vst [vmem:[#allocation8 + $0x70] sm:$0xff] %v2072
    %2090 = vst [vmem:[#allocation8 + $0x78] sm:$0xff] %v2074
    // Predicated region
    $region54: #{tpu_custom_call.1} parent=1 // pred_check
      _
    $region55: #{tpu_custom_call.1} parent=1 // pred_check_branch
      %2092 = sbr.rel (0) target = $region57
    $region56: #{tpu_custom_call.1} parent=1 // pred_region
      %s2094 = ssub.s32 2048, 2048
      %2095 = vsyncadd [#allocation4], %s2094
      %s2096 = sshll.u32 [#allocation8], 4
      %s2097 = int_to_ptr.vmem [resolvable:$true] %s2096
      %2102 = dma.vmem_to_hbm [thread:$0]  %s2097, 2048, %s10, [#allocation4], 128, 128, 8
    $region57: #{tpu_custom_call.1} parent=1 // pred_fallthru
      _
    // Predicated region
    $region58: #{tpu_custom_call.1} parent=1 // pred_check
      _
    $region59: #{tpu_custom_call.1} parent=1 // pred_check_branch
      %2104 = sbr.rel (0) target = $region61
    $region60: #{tpu_custom_call.1} parent=1 // pred_region
      %2105 = dma.done [#allocation4], 2048
    $region61: #{tpu_custom_call.1} parent=1 // pred_fallthru
      _
    %2106 = vsyncpa [#allocation3], 1
    %2107 = vsyncpa [#allocation6], 1
    %2108 = vsyncpa [#allocation4], 1

</llo_original>
